<compile_context>
chip_gen: v7x
topology: tpu7x:2x2x1
jax: 0.10.0
libtpu: 0.0.40
codegen_flags: <defaults>
</compile_context>

<pallas_src>
import functools

import jax
import jax.numpy as jnp
import numpy as np
from jax import lax
from jax.experimental import pallas as pl
from jax.experimental.pallas import tpu as pltpu


# ------------------------------------------------------------------ fused kernel (one batch n)
def _dyn_attn_kernel(x_ref, wdwk_ref, wdwv_ref, wpwk_ref, wpwv_ref, p_ref, pt_ref,
                     o_ref, *, k, pad, C, residual):
    """DynamicAttention forward for one batch element.

    x_ref / o_ref : (T, H, W*C)  lane-dense folded layout (lane = w*C + c)
    wdwk / wdwv   : (k*k, W*C)   depthwise taps tiled over W, W-boundary already zeroed
    wpwk          : (2C-1, W*C)  key 1x1x1 conv as signed lane-shift taps (1/6 folded in)
    wpwv          : (C, W*C)     val 1x1x1 conv collapsed onto `key` (scale/6 folded in)
    p / pt        : (W*C, W), (W, W*C)  0/1 segment-sum / broadcast-back selectors
    """
    T, H, WC = x_ref.shape
    W = WC // C

    row_idx = lax.broadcasted_iota(jnp.int32, (H, 1), 0)   # hoisted, reused by every tap

    def hswish6(v):            # 6*hswish(v); the 1/6 lives in the packed pointwise weights
        return v * jnp.clip(v + 3.0, 0.0, 6.0)

    def depthwise(xt, w_taps):
        """1xkxk depthwise conv of one (H, W*C) time slice.

        H shifts: sublane roll + row mask.  W shifts: lane roll; the W-boundary zeros are
        pre-folded into w_taps, so each tap is roll + mul + add (XLU/VPU slots only).
        """
        acc = None
        for dh in range(k):
            if dh == pad:
                win = xt
            else:
                win = pltpu.roll(xt, (pad - dh) % H, axis=0)
                lo = max(0, pad - dh)
                hi = min(H, H + pad - dh)
                win = jnp.where((row_idx >= lo) & (row_idx < hi), win, 0.0)
            for dw in range(k):
                shift = ((pad - dw) * C) % WC
                sh = pltpu.roll(win, shift, axis=1) if shift else win
                i = dh * k + dw
                tap = sh * w_taps[i:i + 1, :]
                acc = tap if acc is None else acc + tap   # init from first tap (no zeros+add)
        return acc

    wk_dw = wdwk_ref[...].astype(jnp.float32)
    wk_pw = wpwk_ref[...].astype(jnp.float32)

    # -------- pass 1: key branch, streamed over T with a running (1, WC) max --------------
    def key_pass(t, kmax):
        hk = hswish6(depthwise(x_ref[t].astype(jnp.float32), wk_dw))
        kf = None
        # C->C pointwise conv as 2C-1 broadcast-MAC taps over lane rolls (VPU/XLU; the MXU
        # would be <(C/256)^2 filled at these channel counts).
        for j in range(2 * C - 1):
            s = j - (C - 1)
            shift = (-s) % WC
            r = pltpu.roll(hk, shift, axis=1) if shift else hk
            term = r * wk_pw[j:j + 1, :]
            kf = term if kf is None else kf + term
        return jnp.maximum(kmax, jnp.max(kf, axis=0, keepdims=True))

    key_row = lax.fori_loop(0, T, key_pass,
                            jnp.full((1, WC), -jnp.inf, jnp.float32))

    # Max over the W groups folded into the lane axis (butterfly of lane rolls): afterwards
    # every lane w*C + c holds key[c] = max over all (t, h, w).
    step = C
    while step < WC:
        key_row = jnp.maximum(key_row, pltpu.roll(key_row, step, axis=1))
        step *= 2

    # Collapsed val branch: kv[ci] = sum_co Wpw_v[ci, co] * key[co]  (scale/6 folded in).
    wv_pw = wpwv_ref[...].astype(jnp.float32)
    kv = None
    for s in range(C):
        shift = (-s) % WC
        r = pltpu.roll(key_row, shift, axis=1) if shift else key_row
        term = r * wv_pw[s:s + 1, :]
        kv = term if kv is None else kv + term            # (1, WC), W-periodic

    # -------- pass 2: val branch + gate + lane-dense store, streamed over T ---------------
    wv_dw = wdwv_ref[...].astype(jnp.float32)
    p_sel = p_ref[...].astype(jnp.float32)                # (WC, W)
    pt_sel = pt_ref[...].astype(jnp.float32)              # (W, WC)

    def val_pass(t, carry):
        xt = x_ref[t].astype(jnp.float32)                 # reused for conv input and residual
        hv = hswish6(depthwise(xt, wv_dw))
        sv = hv * kv                                      # kv multiply on the VPU (review #2)
        # Per-pixel response = segment-sum of sv over each C-lane group: tiny MXU matmul with
        # W output columns (instead of a width-1 matvec).
        resp = jnp.dot(sv, p_sel, preferred_element_type=jnp.float32)        # (H, W)
        gate = jax.nn.sigmoid(resp)                       # `scale` already folded into kv
        if residual:
            gate = gate + 1.0                             # sigmoid(.)*x + x == (sigmoid(.)+1)*x
        gate_b = jnp.dot(gate, pt_sel, preferred_element_type=jnp.float32)   # (H, WC)
        o_ref[t] = (xt * gate_b).astype(o_ref.dtype)      # lane-dense store
        return carry

    lax.fori_loop(0, T, val_pass, 0)


# ------------------------------------------------------------------ host-side parameter packing
def _pack_depthwise(wdw_pt, W, k, pad):
    """(C,1,1,k,k) PyTorch depthwise weight -> (k*k, W*C) tiled taps, W-boundary zeroed."""
    w_kkc = jnp.transpose(wdw_pt[:, 0, 0], (1, 2, 0))                  # (k, k, C)
    jw = jnp.arange(k)[:, None] + jnp.arange(W)[None, :] - pad         # (k, W)
    valid = ((jw >= 0) & (jw < W)).astype(jnp.float32)
    tiled = w_kkc[:, :, None, :] * valid[None, :, :, None]             # (k, k, W, C)
    return tiled.reshape(k * k, W * wdw_pt.shape[0]).astype(jnp.float32)


def _pack_pointwise_key(wpw_pt, W):
    """(C,C,1,1,1) key 1x1x1 conv -> (2C-1, W*C) signed lane-shift taps, hswish 1/6 folded."""
    C = wpw_pt.shape[0]
    w_io = jnp.transpose(wpw_pt[:, :, 0, 0, 0], (1, 0)) / 6.0          # [ci, co]
    rows = []
    for j in range(2 * C - 1):
        s = j - (C - 1)
        co = jnp.arange(C)
        ci = co + s
        vals = jnp.where((ci >= 0) & (ci < C), w_io[jnp.clip(ci, 0, C - 1), co], 0.0)
        rows.append(jnp.tile(vals, W))
    return jnp.stack(rows, 0).astype(jnp.float32)                      # (2C-1, W*C)


def _pack_pointwise_val(wpw_pt, W, scale):
    """(C,C,1,1,1) val 1x1x1 conv -> (C, W*C) group-circular taps, scale/6 folded."""
    C = wpw_pt.shape[0]
    w_io = jnp.transpose(wpw_pt[:, :, 0, 0, 0], (1, 0)) * (scale / 6.0)
    rows = []
    for s in range(C):
        ci = jnp.arange(C)
        co = (ci + s) % C
        rows.append(jnp.tile(w_io[ci, co], W))
    return jnp.stack(rows, 0).astype(jnp.float32)                      # (C, W*C)


# ------------------------------------------------------------------ wrapper
def dynamic_attention_pallas(x_ncdhw, wdw_k_pt, wpw_k_pt, wdw_v_pt, wpw_v_pt,
                             *, k=3, scale=1.0, residual=True):
    """x_ncdhw: (N, C, T, H, W); weights in PyTorch layouts (norm='none', bias-free convs)."""
    N, C, T, H, W = x_ncdhw.shape
    pad = k // 2
    WC = W * C

    # Layout plumbing to the lane-dense (N, T, H, W*C) slab + parameter packing (host/XLA side).
    x_f = jnp.transpose(x_ncdhw, (0, 2, 3, 4, 1)).reshape(N, T, H, WC)
    wdwk = _pack_depthwise(wdw_k_pt, W, k, pad)
    wdwv = _pack_depthwise(wdw_v_pt, W, k, pad)
    wpwk = _pack_pointwise_key(wpw_k_pt, W)
    wpwv = _pack_pointwise_val(wpw_v_pt, W, scale)
    p_sel = jnp.kron(jnp.eye(W, dtype=jnp.float32), jnp.ones((C, 1), jnp.float32))   # (WC, W)
    pt_sel = p_sel.T                                                                  # (W, WC)

    kern = functools.partial(_dyn_attn_kernel, k=k, pad=pad, C=C, residual=bool(residual))

    blk_bytes = T * H * WC * 4
    wt_bytes = 4 * (wdwk.size + wdwv.size + wpwk.size + wpwv.size + p_sel.size + pt_sel.size)
    # in/out blocks are double-buffered; add headroom for the per-T-slice temporaries.
    vmem_est = 4 * blk_bytes + 2 * wt_bytes + 24 * H * WC * 4 + (2 << 20)
    cp = dict(dimension_semantics=("parallel",))
    if vmem_est > 32 * 1024 * 1024:
        # v5e/v6e have 128 MiB physical VMEM (review: raise toward ~96 MiB for big stages);
        # cap below v7x's 64 MiB so the same kernel still loads there.
        cp["vmem_limit_bytes"] = min(int(vmem_est), 60 * 1024 * 1024)

    out_f = pl.pallas_call(
        kern,
        out_shape=jax.ShapeDtypeStruct((N, T, H, WC), x_ncdhw.dtype),
        grid_spec=pltpu.PrefetchScalarGridSpec(
            num_scalar_prefetch=0,
            grid=(N,),
            in_specs=[
                pl.BlockSpec((None, T, H, WC), lambda n: (n, 0, 0, 0)),
                pl.BlockSpec((k * k, WC), lambda n: (0, 0)),
                pl.BlockSpec((k * k, WC), lambda n: (0, 0)),
                pl.BlockSpec((2 * C - 1, WC), lambda n: (0, 0)),
                pl.BlockSpec((C, WC), lambda n: (0, 0)),
                pl.BlockSpec((WC, W), lambda n: (0, 0)),
                pl.BlockSpec((W, WC), lambda n: (0, 0)),
            ],
            out_specs=pl.BlockSpec((None, T, H, WC), lambda n: (n, 0, 0, 0)),
        ),
        compiler_params=pltpu.CompilerParams(**cp),
    )(x_f, wdwk, wdwv, wpwk, wpwv, p_sel, pt_sel)

    return jnp.transpose(out_f.reshape(N, T, H, W, C), (0, 4, 1, 2, 3))


# ------------------------------------------------------------------ pure-JAX reference (NCDHW)
def _reference_ncdhw(x_ncdhw, wdw_k_pt, wpw_k_pt, wdw_v_pt, wpw_v_pt,
                     *, k=3, scale=1.0, residual=True):
    C = x_ncdhw.shape[1]
    pad = k // 2
    dn = ('NCDHW', 'OIDHW', 'NCDHW')

    def dw(x, w):   # depthwise 1xkxk, groups=C
        return lax.conv_general_dilated(x, w, (1, 1, 1),
                                        [(0, 0), (pad, pad), (pad, pad)],
                                        dimension_numbers=dn, feature_group_count=C)

    def pw(x, w):   # 1x1x1 conv
        return lax.conv_general_dilated(x, w, (1, 1, 1),
                                        [(0, 0), (0, 0), (0, 0)],
                                        dimension_numbers=dn)

    def hswish(v):
        return v * jnp.clip(v + 3.0, 0.0, 6.0) / 6.0

    key = pw(hswish(dw(x_ncdhw, wdw_k_pt)), wpw_k_pt)
    key = jnp.max(key, axis=(2, 3, 4), keepdims=True)          # AdaptiveMaxPool3d((1,1,1))
    val = pw(hswish(dw(x_ncdhw, wdw_v_pt)), wpw_v_pt)
    resp = jnp.sum(key * val, axis=1, keepdims=True)
    mask = jax.nn.sigmoid(scale * resp)
    out = mask * x_ncdhw
    return out + x_ncdhw if residual else out


if __name__ == "__main__":
    # Small shapes consistent with DynamicAttention: input (N, C, T, H, W).
    N, C, T, H, W = 2, 8, 4, 8, 16
    K, SCALE, RESIDUAL = 3, 1.25, True

    root = jax.random.PRNGKey(0)
    kx, k1, k2, k3, k4 = jax.random.split(root, 5)

    x_ncdhw = jax.random.normal(kx, (N, C, T, H, W), jnp.float32)
    wdw_k_pt = jax.random.normal(k1, (C, 1, 1, K, K), jnp.float32) * (1.0 / (K * K))
    wpw_k_pt = jax.random.normal(k2, (C, C, 1, 1, 1), jnp.float32) * (1.0 / C)
    wdw_v_pt = jax.random.normal(k3, (C, 1, 1, K, K), jnp.float32) * (1.0 / (K * K))
    wpw_v_pt = jax.random.normal(k4, (C, C, 1, 1, 1), jnp.float32) * (1.0 / C)

    out = dynamic_attention_pallas(x_ncdhw, wdw_k_pt, wpw_k_pt, wdw_v_pt, wpw_v_pt,
                                   k=K, scale=SCALE, residual=RESIDUAL)
    out = jax.block_until_ready(out)

    ref = _reference_ncdhw(x_ncdhw, wdw_k_pt, wpw_k_pt, wdw_v_pt, wpw_v_pt,
                           k=K, scale=SCALE, residual=RESIDUAL)
    ref = jax.block_until_ready(ref)

    np.testing.assert_allclose(np.asarray(out), np.asarray(ref), rtol=1e-4, atol=1e-4)
    print("KERNEL_OK")
</pallas_src>

<mosaic_0001>
module attributes {stable_mosaic.version = 11 : i64} {
  func.func @_dyn_attn_kernel(%arg0: i32, %arg1: memref<1x4x8x128xf32, #tpu.memory_space<vmem>>, %arg2: memref<9x128xf32, #tpu.memory_space<vmem>>, %arg3: memref<9x128xf32, #tpu.memory_space<vmem>>, %arg4: memref<15x128xf32, #tpu.memory_space<vmem>>, %arg5: memref<8x128xf32, #tpu.memory_space<vmem>>, %arg6: memref<128x16xf32, #tpu.memory_space<vmem>>, %arg7: memref<16x128xf32, #tpu.memory_space<vmem>>, %arg8: memref<1x4x8x128xf32, #tpu.memory_space<vmem>>) attributes {dimension_semantics = [#tpu.dimension_semantics<parallel>], iteration_bounds = array<i64: 2>, scalar_prefetch = 0 : i64, scratch_operands = 0 : i64, tpu.core_type = #tpu.core_type<tc>, window_params = [{transform_indices = @transform_0, window_bounds = array<i64: 1, 4, 8, 128>}, {pipeline_mode = #tpu.pipeline_mode<synchronous>, transform_indices = @transform_1, window_bounds = array<i64: 9, 128>}, {pipeline_mode = #tpu.pipeline_mode<synchronous>, transform_indices = @transform_2, window_bounds = array<i64: 9, 128>}, {pipeline_mode = #tpu.pipeline_mode<synchronous>, transform_indices = @transform_3, window_bounds = array<i64: 15, 128>}, {pipeline_mode = #tpu.pipeline_mode<synchronous>, transform_indices = @transform_4, window_bounds = array<i64: 8, 128>}, {pipeline_mode = #tpu.pipeline_mode<synchronous>, transform_indices = @transform_5, window_bounds = array<i64: 128, 16>}, {pipeline_mode = #tpu.pipeline_mode<synchronous>, transform_indices = @transform_6, window_bounds = array<i64: 16, 128>}, {transform_indices = @transform_7, window_bounds = array<i64: 1, 4, 8, 128>}]} {
    %0 = tpu.iota {dimensions = array<i32: 0>} : vector<8x1xi32>
    %c0 = arith.constant 0 : index
    %c0_0 = arith.constant 0 : index
    %1 = vector.load %arg2[%c0, %c0_0] : memref<9x128xf32, #tpu.memory_space<vmem>>, vector<9x128xf32>
    %c0_1 = arith.constant 0 : index
    %c0_2 = arith.constant 0 : index
    %2 = vector.load %arg4[%c0_1, %c0_2] : memref<15x128xf32, #tpu.memory_space<vmem>>, vector<15x128xf32>
    %cst = arith.constant 0xFF800000 : f32
    %3 = vector.broadcast %cst : f32 to vector<1x128xf32>
    %c0_i32 = arith.constant 0 : i32
    %c4_i32 = arith.constant 4 : i32
    %4 = arith.addi %c0_i32, %c4_i32 : i32
    %c1_i32 = arith.constant 1 : i32
    %5 = scf.for %arg9 = %c0_i32 to %4 step %c1_i32 iter_args(%arg10 = %3) -> (vector<1x128xf32>)  : i32 {
      %c0_16 = arith.constant 0 : index
      %49 = arith.index_cast %arg9 : i32 to index
      %c0_17 = arith.constant 0 : index
      %c0_18 = arith.constant 0 : index
      %50 = vector.load %arg1[%c0_16, %49, %c0_17, %c0_18] : memref<1x4x8x128xf32, #tpu.memory_space<vmem>>, vector<1x1x8x128xf32>
      %51 = vector.shape_cast %50 : vector<1x1x8x128xf32> to vector<8x128xf32>
      %c1_i32_19 = arith.constant 1 : i32
      %52 = tpu.dynamic_rotate %51 by %c1_i32_19 dim 0 : vector<8x128xf32>, i32 -> vector<8x128xf32>
      %c1_i32_20 = arith.constant 1 : i32
      %53 = vector.broadcast %c1_i32_20 : i32 to vector<8x1xi32>
      %54 = arith.cmpi sge, %0, %53 : vector<8x1xi32>
      %c8_i32_21 = arith.constant 8 : i32
      %55 = vector.broadcast %c8_i32_21 : i32 to vector<8x1xi32>
      %56 = arith.cmpi slt, %0, %55 : vector<8x1xi32>
      %57 = arith.andi %54, %56 : vector<8x1xi1>
      %cst_22 = arith.constant 0.000000e+00 : f32
      %58 = vector.shape_cast %57 : vector<8x1xi1> to vector<8x1xi1>
      %59 = vector.broadcast %58 : vector<8x1xi1> to vector<8x128xi1>
      %60 = vector.broadcast %cst_22 : f32 to vector<8x128xf32>
      %61 = arith.select %59, %52, %60 : vector<8x128xi1>, vector<8x128xf32>
      %c8_i32_23 = arith.constant 8 : i32
      %62 = tpu.dynamic_rotate %61 by %c8_i32_23 dim 1 : vector<8x128xf32>, i32 -> vector<8x128xf32>
      %63 = vector.extract_strided_slice %1 {offsets = [0, 0], sizes = [1, 128], strides = [1, 1]} : vector<9x128xf32> to vector<1x128xf32>
      %64 = vector.broadcast %63 : vector<1x128xf32> to vector<8x128xf32>
      %65 = arith.mulf %62, %64 : vector<8x128xf32>
      %66 = vector.extract_strided_slice %1 {offsets = [1, 0], sizes = [1, 128], strides = [1, 1]} : vector<9x128xf32> to vector<1x128xf32>
      %67 = vector.broadcast %66 : vector<1x128xf32> to vector<8x128xf32>
      %68 = arith.mulf %61, %67 : vector<8x128xf32>
      %69 = arith.addf %65, %68 : vector<8x128xf32>
      %c120_i32 = arith.constant 120 : i32
      %70 = tpu.dynamic_rotate %61 by %c120_i32 dim 1 : vector<8x128xf32>, i32 -> vector<8x128xf32>
      %71 = vector.extract_strided_slice %1 {offsets = [2, 0], sizes = [1, 128], strides = [1, 1]} : vector<9x128xf32> to vector<1x128xf32>
      %72 = vector.broadcast %71 : vector<1x128xf32> to vector<8x128xf32>
      %73 = arith.mulf %70, %72 : vector<8x128xf32>
      %74 = arith.addf %69, %73 : vector<8x128xf32>
      %c8_i32_24 = arith.constant 8 : i32
      %75 = tpu.dynamic_rotate %51 by %c8_i32_24 dim 1 : vector<8x128xf32>, i32 -> vector<8x128xf32>
      %76 = vector.extract_strided_slice %1 {offsets = [3, 0], sizes = [1, 128], strides = [1, 1]} : vector<9x128xf32> to vector<1x128xf32>
      %77 = vector.broadcast %76 : vector<1x128xf32> to vector<8x128xf32>
      %78 = arith.mulf %75, %77 : vector<8x128xf32>
      %79 = arith.addf %74, %78 : vector<8x128xf32>
      %80 = vector.extract_strided_slice %1 {offsets = [4, 0], sizes = [1, 128], strides = [1, 1]} : vector<9x128xf32> to vector<1x128xf32>
      %81 = vector.broadcast %80 : vector<1x128xf32> to vector<8x128xf32>
      %82 = arith.mulf %51, %81 : vector<8x128xf32>
      %83 = arith.addf %79, %82 : vector<8x128xf32>
      %c120_i32_25 = arith.constant 120 : i32
      %84 = tpu.dynamic_rotate %51 by %c120_i32_25 dim 1 : vector<8x128xf32>, i32 -> vector<8x128xf32>
      %85 = vector.extract_strided_slice %1 {offsets = [5, 0], sizes = [1, 128], strides = [1, 1]} : vector<9x128xf32> to vector<1x128xf32>
      %86 = vector.broadcast %85 : vector<1x128xf32> to vector<8x128xf32>
      %87 = arith.mulf %84, %86 : vector<8x128xf32>
      %88 = arith.addf %83, %87 : vector<8x128xf32>
      %c7_i32 = arith.constant 7 : i32
      %89 = tpu.dynamic_rotate %51 by %c7_i32 dim 0 : vector<8x128xf32>, i32 -> vector<8x128xf32>
      %c0_i32_26 = arith.constant 0 : i32
      %90 = vector.broadcast %c0_i32_26 : i32 to vector<8x1xi32>
      %91 = arith.cmpi sge, %0, %90 : vector<8x1xi32>
      %c7_i32_27 = arith.constant 7 : i32
      %92 = vector.broadcast %c7_i32_27 : i32 to vector<8x1xi32>
      %93 = arith.cmpi slt, %0, %92 : vector<8x1xi32>
      %94 = arith.andi %91, %93 : vector<8x1xi1>
      %cst_28 = arith.constant 0.000000e+00 : f32
      %95 = vector.shape_cast %94 : vector<8x1xi1> to vector<8x1xi1>
      %96 = vector.broadcast %95 : vector<8x1xi1> to vector<8x128xi1>
      %97 = vector.broadcast %cst_28 : f32 to vector<8x128xf32>
      %98 = arith.select %96, %89, %97 : vector<8x128xi1>, vector<8x128xf32>
      %c8_i32_29 = arith.constant 8 : i32
      %99 = tpu.dynamic_rotate %98 by %c8_i32_29 dim 1 : vector<8x128xf32>, i32 -> vector<8x128xf32>
      %100 = vector.extract_strided_slice %1 {offsets = [6, 0], sizes = [1, 128], strides = [1, 1]} : vector<9x128xf32> to vector<1x128xf32>
      %101 = vector.broadcast %100 : vector<1x128xf32> to vector<8x128xf32>
      %102 = arith.mulf %99, %101 : vector<8x128xf32>
      %103 = arith.addf %88, %102 : vector<8x128xf32>
      %104 = vector.extract_strided_slice %1 {offsets = [7, 0], sizes = [1, 128], strides = [1, 1]} : vector<9x128xf32> to vector<1x128xf32>
      %105 = vector.broadcast %104 : vector<1x128xf32> to vector<8x128xf32>
      %106 = arith.mulf %98, %105 : vector<8x128xf32>
      %107 = arith.addf %103, %106 : vector<8x128xf32>
      %c120_i32_30 = arith.constant 120 : i32
      %108 = tpu.dynamic_rotate %98 by %c120_i32_30 dim 1 : vector<8x128xf32>, i32 -> vector<8x128xf32>
      %109 = vector.extract_strided_slice %1 {offsets = [8, 0], sizes = [1, 128], strides = [1, 1]} : vector<9x128xf32> to vector<1x128xf32>
      %110 = vector.broadcast %109 : vector<1x128xf32> to vector<8x128xf32>
      %111 = arith.mulf %108, %110 : vector<8x128xf32>
      %112 = arith.addf %107, %111 : vector<8x128xf32>
      %cst_31 = arith.constant 3.000000e+00 : f32
      %113 = vector.broadcast %cst_31 : f32 to vector<8x128xf32>
      %114 = arith.addf %112, %113 : vector<8x128xf32>
      %cst_32 = arith.constant 0.000000e+00 : f32
      %cst_33 = arith.constant 6.000000e+00 : f32
      %115 = vector.broadcast %cst_32 : f32 to vector<8x128xf32>
      %116 = arith.maximumf %115, %114 : vector<8x128xf32>
      %117 = vector.broadcast %cst_33 : f32 to vector<8x128xf32>
      %118 = arith.minimumf %117, %116 : vector<8x128xf32>
      %119 = arith.mulf %112, %118 : vector<8x128xf32>
      %c7_i32_34 = arith.constant 7 : i32
      %120 = tpu.dynamic_rotate %119 by %c7_i32_34 dim 1 : vector<8x128xf32>, i32 -> vector<8x128xf32>
      %121 = vector.extract_strided_slice %2 {offsets = [0, 0], sizes = [1, 128], strides = [1, 1]} : vector<15x128xf32> to vector<1x128xf32>
      %122 = vector.broadcast %121 : vector<1x128xf32> to vector<8x128xf32>
      %123 = arith.mulf %120, %122 : vector<8x128xf32>
      %c6_i32 = arith.constant 6 : i32
      %124 = tpu.dynamic_rotate %119 by %c6_i32 dim 1 : vector<8x128xf32>, i32 -> vector<8x128xf32>
      %125 = vector.extract_strided_slice %2 {offsets = [1, 0], sizes = [1, 128], strides = [1, 1]} : vector<15x128xf32> to vector<1x128xf32>
      %126 = vector.broadcast %125 : vector<1x128xf32> to vector<8x128xf32>
      %127 = arith.mulf %124, %126 : vector<8x128xf32>
      %128 = arith.addf %123, %127 : vector<8x128xf32>
      %c5_i32 = arith.constant 5 : i32
      %129 = tpu.dynamic_rotate %119 by %c5_i32 dim 1 : vector<8x128xf32>, i32 -> vector<8x128xf32>
      %130 = vector.extract_strided_slice %2 {offsets = [2, 0], sizes = [1, 128], strides = [1, 1]} : vector<15x128xf32> to vector<1x128xf32>
      %131 = vector.broadcast %130 : vector<1x128xf32> to vector<8x128xf32>
      %132 = arith.mulf %129, %131 : vector<8x128xf32>
      %133 = arith.addf %128, %132 : vector<8x128xf32>
      %c4_i32_35 = arith.constant 4 : i32
      %134 = tpu.dynamic_rotate %119 by %c4_i32_35 dim 1 : vector<8x128xf32>, i32 -> vector<8x128xf32>
      %135 = vector.extract_strided_slice %2 {offsets = [3, 0], sizes = [1, 128], strides = [1, 1]} : vector<15x128xf32> to vector<1x128xf32>
      %136 = vector.broadcast %135 : vector<1x128xf32> to vector<8x128xf32>
      %137 = arith.mulf %134, %136 : vector<8x128xf32>
      %138 = arith.addf %133, %137 : vector<8x128xf32>
      %c3_i32 = arith.constant 3 : i32
      %139 = tpu.dynamic_rotate %119 by %c3_i32 dim 1 : vector<8x128xf32>, i32 -> vector<8x128xf32>
      %140 = vector.extract_strided_slice %2 {offsets = [4, 0], sizes = [1, 128], strides = [1, 1]} : vector<15x128xf32> to vector<1x128xf32>
      %141 = vector.broadcast %140 : vector<1x128xf32> to vector<8x128xf32>
      %142 = arith.mulf %139, %141 : vector<8x128xf32>
      %143 = arith.addf %138, %142 : vector<8x128xf32>
      %c2_i32 = arith.constant 2 : i32
      %144 = tpu.dynamic_rotate %119 by %c2_i32 dim 1 : vector<8x128xf32>, i32 -> vector<8x128xf32>
      %145 = vector.extract_strided_slice %2 {offsets = [5, 0], sizes = [1, 128], strides = [1, 1]} : vector<15x128xf32> to vector<1x128xf32>
      %146 = vector.broadcast %145 : vector<1x128xf32> to vector<8x128xf32>
      %147 = arith.mulf %144, %146 : vector<8x128xf32>
      %148 = arith.addf %143, %147 : vector<8x128xf32>
      %c1_i32_36 = arith.constant 1 : i32
      %149 = tpu.dynamic_rotate %119 by %c1_i32_36 dim 1 : vector<8x128xf32>, i32 -> vector<8x128xf32>
      %150 = vector.extract_strided_slice %2 {offsets = [6, 0], sizes = [1, 128], strides = [1, 1]} : vector<15x128xf32> to vector<1x128xf32>
      %151 = vector.broadcast %150 : vector<1x128xf32> to vector<8x128xf32>
      %152 = arith.mulf %149, %151 : vector<8x128xf32>
      %153 = arith.addf %148, %152 : vector<8x128xf32>
      %154 = vector.extract_strided_slice %2 {offsets = [7, 0], sizes = [1, 128], strides = [1, 1]} : vector<15x128xf32> to vector<1x128xf32>
      %155 = vector.broadcast %154 : vector<1x128xf32> to vector<8x128xf32>
      %156 = arith.mulf %119, %155 : vector<8x128xf32>
      %157 = arith.addf %153, %156 : vector<8x128xf32>
      %c127_i32_37 = arith.constant 127 : i32
      %158 = tpu.dynamic_rotate %119 by %c127_i32_37 dim 1 : vector<8x128xf32>, i32 -> vector<8x128xf32>
      %159 = vector.extract_strided_slice %2 {offsets = [8, 0], sizes = [1, 128], strides = [1, 1]} : vector<15x128xf32> to vector<1x128xf32>
      %160 = vector.broadcast %159 : vector<1x128xf32> to vector<8x128xf32>
      %161 = arith.mulf %158, %160 : vector<8x128xf32>
      %162 = arith.addf %157, %161 : vector<8x128xf32>
      %c126_i32_38 = arith.constant 126 : i32
      %163 = tpu.dynamic_rotate %119 by %c126_i32_38 dim 1 : vector<8x128xf32>, i32 -> vector<8x128xf32>
      %164 = vector.extract_strided_slice %2 {offsets = [9, 0], sizes = [1, 128], strides = [1, 1]} : vector<15x128xf32> to vector<1x128xf32>
      %165 = vector.broadcast %164 : vector<1x128xf32> to vector<8x128xf32>
      %166 = arith.mulf %163, %165 : vector<8x128xf32>
      %167 = arith.addf %162, %166 : vector<8x128xf32>
      %c125_i32_39 = arith.constant 125 : i32
      %168 = tpu.dynamic_rotate %119 by %c125_i32_39 dim 1 : vector<8x128xf32>, i32 -> vector<8x128xf32>
      %169 = vector.extract_strided_slice %2 {offsets = [10, 0], sizes = [1, 128], strides = [1, 1]} : vector<15x128xf32> to vector<1x128xf32>
      %170 = vector.broadcast %169 : vector<1x128xf32> to vector<8x128xf32>
      %171 = arith.mulf %168, %170 : vector<8x128xf32>
      %172 = arith.addf %167, %171 : vector<8x128xf32>
      %c124_i32_40 = arith.constant 124 : i32
      %173 = tpu.dynamic_rotate %119 by %c124_i32_40 dim 1 : vector<8x128xf32>, i32 -> vector<8x128xf32>
      %174 = vector.extract_strided_slice %2 {offsets = [11, 0], sizes = [1, 128], strides = [1, 1]} : vector<15x128xf32> to vector<1x128xf32>
      %175 = vector.broadcast %174 : vector<1x128xf32> to vector<8x128xf32>
      %176 = arith.mulf %173, %175 : vector<8x128xf32>
      %177 = arith.addf %172, %176 : vector<8x128xf32>
      %c123_i32_41 = arith.constant 123 : i32
      %178 = tpu.dynamic_rotate %119 by %c123_i32_41 dim 1 : vector<8x128xf32>, i32 -> vector<8x128xf32>
      %179 = vector.extract_strided_slice %2 {offsets = [12, 0], sizes = [1, 128], strides = [1, 1]} : vector<15x128xf32> to vector<1x128xf32>
      %180 = vector.broadcast %179 : vector<1x128xf32> to vector<8x128xf32>
      %181 = arith.mulf %178, %180 : vector<8x128xf32>
      %182 = arith.addf %177, %181 : vector<8x128xf32>
      %c122_i32_42 = arith.constant 122 : i32
      %183 = tpu.dynamic_rotate %119 by %c122_i32_42 dim 1 : vector<8x128xf32>, i32 -> vector<8x128xf32>
      %184 = vector.extract_strided_slice %2 {offsets = [13, 0], sizes = [1, 128], strides = [1, 1]} : vector<15x128xf32> to vector<1x128xf32>
      %185 = vector.broadcast %184 : vector<1x128xf32> to vector<8x128xf32>
      %186 = arith.mulf %183, %185 : vector<8x128xf32>
      %187 = arith.addf %182, %186 : vector<8x128xf32>
      %c121_i32_43 = arith.constant 121 : i32
      %188 = tpu.dynamic_rotate %119 by %c121_i32_43 dim 1 : vector<8x128xf32>, i32 -> vector<8x128xf32>
      %189 = vector.extract_strided_slice %2 {offsets = [14, 0], sizes = [1, 128], strides = [1, 1]} : vector<15x128xf32> to vector<1x128xf32>
      %190 = vector.broadcast %189 : vector<1x128xf32> to vector<8x128xf32>
      %191 = arith.mulf %188, %190 : vector<8x128xf32>
      %192 = arith.addf %187, %191 : vector<8x128xf32>
      %cst_44 = arith.constant dense<0xFF800000> : vector<128xf32>
      %193 = vector.multi_reduction <maximumf>, %192, %cst_44 [0] : vector<8x128xf32> to vector<128xf32>
      %194 = vector.shape_cast %193 : vector<128xf32> to vector<1x128xf32>
      %195 = arith.maximumf %arg10, %194 : vector<1x128xf32>
      scf.yield %195 : vector<1x128xf32>
    }
    %c4_i32_3 = arith.constant 4 : i32
    %c8_i32 = arith.constant 8 : i32
    %6 = tpu.dynamic_rotate %5 by %c8_i32 dim 1 : vector<1x128xf32>, i32 -> vector<1x128xf32>
    %7 = arith.maximumf %5, %6 : vector<1x128xf32>
    %c16_i32 = arith.constant 16 : i32
    %8 = tpu.dynamic_rotate %7 by %c16_i32 dim 1 : vector<1x128xf32>, i32 -> vector<1x128xf32>
    %9 = arith.maximumf %7, %8 : vector<1x128xf32>
    %c32_i32 = arith.constant 32 : i32
    %10 = tpu.dynamic_rotate %9 by %c32_i32 dim 1 : vector<1x128xf32>, i32 -> vector<1x128xf32>
    %11 = arith.maximumf %9, %10 : vector<1x128xf32>
    %c64_i32 = arith.constant 64 : i32
    %12 = tpu.dynamic_rotate %11 by %c64_i32 dim 1 : vector<1x128xf32>, i32 -> vector<1x128xf32>
    %13 = arith.maximumf %11, %12 : vector<1x128xf32>
    %c0_4 = arith.constant 0 : index
    %c0_5 = arith.constant 0 : index
    %14 = vector.load %arg5[%c0_4, %c0_5] : memref<8x128xf32, #tpu.memory_space<vmem>>, vector<8x128xf32>
    %15 = vector.extract_strided_slice %14 {offsets = [0, 0], sizes = [1, 128], strides = [1, 1]} : vector<8x128xf32> to vector<1x128xf32>
    %16 = arith.mulf %13, %15 : vector<1x128xf32>
    %c127_i32 = arith.constant 127 : i32
    %17 = tpu.dynamic_rotate %13 by %c127_i32 dim 1 : vector<1x128xf32>, i32 -> vector<1x128xf32>
    %18 = vector.extract_strided_slice %14 {offsets = [1, 0], sizes = [1, 128], strides = [1, 1]} : vector<8x128xf32> to vector<1x128xf32>
    %19 = arith.mulf %17, %18 : vector<1x128xf32>
    %20 = arith.addf %16, %19 : vector<1x128xf32>
    %c126_i32 = arith.constant 126 : i32
    %21 = tpu.dynamic_rotate %13 by %c126_i32 dim 1 : vector<1x128xf32>, i32 -> vector<1x128xf32>
    %22 = vector.extract_strided_slice %14 {offsets = [2, 0], sizes = [1, 128], strides = [1, 1]} : vector<8x128xf32> to vector<1x128xf32>
    %23 = arith.mulf %21, %22 : vector<1x128xf32>
    %24 = arith.addf %20, %23 : vector<1x128xf32>
    %c125_i32 = arith.constant 125 : i32
    %25 = tpu.dynamic_rotate %13 by %c125_i32 dim 1 : vector<1x128xf32>, i32 -> vector<1x128xf32>
    %26 = vector.extract_strided_slice %14 {offsets = [3, 0], sizes = [1, 128], strides = [1, 1]} : vector<8x128xf32> to vector<1x128xf32>
    %27 = arith.mulf %25, %26 : vector<1x128xf32>
    %28 = arith.addf %24, %27 : vector<1x128xf32>
    %c124_i32 = arith.constant 124 : i32
    %29 = tpu.dynamic_rotate %13 by %c124_i32 dim 1 : vector<1x128xf32>, i32 -> vector<1x128xf32>
    %30 = vector.extract_strided_slice %14 {offsets = [4, 0], sizes = [1, 128], strides = [1, 1]} : vector<8x128xf32> to vector<1x128xf32>
    %31 = arith.mulf %29, %30 : vector<1x128xf32>
    %32 = arith.addf %28, %31 : vector<1x128xf32>
    %c123_i32 = arith.constant 123 : i32
    %33 = tpu.dynamic_rotate %13 by %c123_i32 dim 1 : vector<1x128xf32>, i32 -> vector<1x128xf32>
    %34 = vector.extract_strided_slice %14 {offsets = [5, 0], sizes = [1, 128], strides = [1, 1]} : vector<8x128xf32> to vector<1x128xf32>
    %35 = arith.mulf %33, %34 : vector<1x128xf32>
    %36 = arith.addf %32, %35 : vector<1x128xf32>
    %c122_i32 = arith.constant 122 : i32
    %37 = tpu.dynamic_rotate %13 by %c122_i32 dim 1 : vector<1x128xf32>, i32 -> vector<1x128xf32>
    %38 = vector.extract_strided_slice %14 {offsets = [6, 0], sizes = [1, 128], strides = [1, 1]} : vector<8x128xf32> to vector<1x128xf32>
    %39 = arith.mulf %37, %38 : vector<1x128xf32>
    %40 = arith.addf %36, %39 : vector<1x128xf32>
    %c121_i32 = arith.constant 121 : i32
    %41 = tpu.dynamic_rotate %13 by %c121_i32 dim 1 : vector<1x128xf32>, i32 -> vector<1x128xf32>
    %42 = vector.extract_strided_slice %14 {offsets = [7, 0], sizes = [1, 128], strides = [1, 1]} : vector<8x128xf32> to vector<1x128xf32>
    %43 = arith.mulf %41, %42 : vector<1x128xf32>
    %44 = arith.addf %40, %43 : vector<1x128xf32>
    %c0_6 = arith.constant 0 : index
    %c0_7 = arith.constant 0 : index
    %45 = vector.load %arg3[%c0_6, %c0_7] : memref<9x128xf32, #tpu.memory_space<vmem>>, vector<9x128xf32>
    %c0_8 = arith.constant 0 : index
    %c0_9 = arith.constant 0 : index
    %46 = vector.load %arg6[%c0_8, %c0_9] : memref<128x16xf32, #tpu.memory_space<vmem>>, vector<128x16xf32>
    %c0_10 = arith.constant 0 : index
    %c0_11 = arith.constant 0 : index
    %47 = vector.load %arg7[%c0_10, %c0_11] : memref<16x128xf32, #tpu.memory_space<vmem>>, vector<16x128xf32>
    %c0_i32_12 = arith.constant 0 : i32
    %c4_i32_13 = arith.constant 4 : i32
    %48 = arith.addi %c0_i32_12, %c4_i32_13 : i32
    %c1_i32_14 = arith.constant 1 : i32
    scf.for %arg9 = %c0_i32_12 to %48 step %c1_i32_14  : i32 {
      %c0_16 = arith.constant 0 : index
      %49 = arith.index_cast %arg9 : i32 to index
      %c0_17 = arith.constant 0 : index
      %c0_18 = arith.constant 0 : index
      %50 = vector.load %arg1[%c0_16, %49, %c0_17, %c0_18] : memref<1x4x8x128xf32, #tpu.memory_space<vmem>>, vector<1x1x8x128xf32>
      %51 = vector.shape_cast %50 : vector<1x1x8x128xf32> to vector<8x128xf32>
      %c1_i32_19 = arith.constant 1 : i32
      %52 = tpu.dynamic_rotate %51 by %c1_i32_19 dim 0 : vector<8x128xf32>, i32 -> vector<8x128xf32>
      %c1_i32_20 = arith.constant 1 : i32
      %53 = vector.broadcast %c1_i32_20 : i32 to vector<8x1xi32>
      %54 = arith.cmpi sge, %0, %53 : vector<8x1xi32>
      %c8_i32_21 = arith.constant 8 : i32
      %55 = vector.broadcast %c8_i32_21 : i32 to vector<8x1xi32>
      %56 = arith.cmpi slt, %0, %55 : vector<8x1xi32>
      %57 = arith.andi %54, %56 : vector<8x1xi1>
      %cst_22 = arith.constant 0.000000e+00 : f32
      %58 = vector.shape_cast %57 : vector<8x1xi1> to vector<8x1xi1>
      %59 = vector.broadcast %58 : vector<8x1xi1> to vector<8x128xi1>
      %60 = vector.broadcast %cst_22 : f32 to vector<8x128xf32>
      %61 = arith.select %59, %52, %60 : vector<8x128xi1>, vector<8x128xf32>
      %c8_i32_23 = arith.constant 8 : i32
      %62 = tpu.dynamic_rotate %61 by %c8_i32_23 dim 1 : vector<8x128xf32>, i32 -> vector<8x128xf32>
      %63 = vector.extract_strided_slice %45 {offsets = [0, 0], sizes = [1, 128], strides = [1, 1]} : vector<9x128xf32> to vector<1x128xf32>
      %64 = vector.broadcast %63 : vector<1x128xf32> to vector<8x128xf32>
      %65 = arith.mulf %62, %64 : vector<8x128xf32>
      %66 = vector.extract_strided_slice %45 {offsets = [1, 0], sizes = [1, 128], strides = [1, 1]} : vector<9x128xf32> to vector<1x128xf32>
      %67 = vector.broadcast %66 : vector<1x128xf32> to vector<8x128xf32>
      %68 = arith.mulf %61, %67 : vector<8x128xf32>
      %69 = arith.addf %65, %68 : vector<8x128xf32>
      %c120_i32 = arith.constant 120 : i32
      %70 = tpu.dynamic_rotate %61 by %c120_i32 dim 1 : vector<8x128xf32>, i32 -> vector<8x128xf32>
      %71 = vector.extract_strided_slice %45 {offsets = [2, 0], sizes = [1, 128], strides = [1, 1]} : vector<9x128xf32> to vector<1x128xf32>
      %72 = vector.broadcast %71 : vector<1x128xf32> to vector<8x128xf32>
      %73 = arith.mulf %70, %72 : vector<8x128xf32>
      %74 = arith.addf %69, %73 : vector<8x128xf32>
      %c8_i32_24 = arith.constant 8 : i32
      %75 = tpu.dynamic_rotate %51 by %c8_i32_24 dim 1 : vector<8x128xf32>, i32 -> vector<8x128xf32>
      %76 = vector.extract_strided_slice %45 {offsets = [3, 0], sizes = [1, 128], strides = [1, 1]} : vector<9x128xf32> to vector<1x128xf32>
      %77 = vector.broadcast %76 : vector<1x128xf32> to vector<8x128xf32>
      %78 = arith.mulf %75, %77 : vector<8x128xf32>
      %79 = arith.addf %74, %78 : vector<8x128xf32>
      %80 = vector.extract_strided_slice %45 {offsets = [4, 0], sizes = [1, 128], strides = [1, 1]} : vector<9x128xf32> to vector<1x128xf32>
      %81 = vector.broadcast %80 : vector<1x128xf32> to vector<8x128xf32>
      %82 = arith.mulf %51, %81 : vector<8x128xf32>
      %83 = arith.addf %79, %82 : vector<8x128xf32>
      %c120_i32_25 = arith.constant 120 : i32
      %84 = tpu.dynamic_rotate %51 by %c120_i32_25 dim 1 : vector<8x128xf32>, i32 -> vector<8x128xf32>
      %85 = vector.extract_strided_slice %45 {offsets = [5, 0], sizes = [1, 128], strides = [1, 1]} : vector<9x128xf32> to vector<1x128xf32>
      %86 = vector.broadcast %85 : vector<1x128xf32> to vector<8x128xf32>
      %87 = arith.mulf %84, %86 : vector<8x128xf32>
      %88 = arith.addf %83, %87 : vector<8x128xf32>
      %c7_i32 = arith.constant 7 : i32
      %89 = tpu.dynamic_rotate %51 by %c7_i32 dim 0 : vector<8x128xf32>, i32 -> vector<8x128xf32>
      %c0_i32_26 = arith.constant 0 : i32
      %90 = vector.broadcast %c0_i32_26 : i32 to vector<8x1xi32>
      %91 = arith.cmpi sge, %0, %90 : vector<8x1xi32>
      %c7_i32_27 = arith.constant 7 : i32
      %92 = vector.broadcast %c7_i32_27 : i32 to vector<8x1xi32>
      %93 = arith.cmpi slt, %0, %92 : vector<8x1xi32>
      %94 = arith.andi %91, %93 : vector<8x1xi1>
      %cst_28 = arith.constant 0.000000e+00 : f32
      %95 = vector.shape_cast %94 : vector<8x1xi1> to vector<8x1xi1>
      %96 = vector.broadcast %95 : vector<8x1xi1> to vector<8x128xi1>
      %97 = vector.broadcast %cst_28 : f32 to vector<8x128xf32>
      %98 = arith.select %96, %89, %97 : vector<8x128xi1>, vector<8x128xf32>
      %c8_i32_29 = arith.constant 8 : i32
      %99 = tpu.dynamic_rotate %98 by %c8_i32_29 dim 1 : vector<8x128xf32>, i32 -> vector<8x128xf32>
      %100 = vector.extract_strided_slice %45 {offsets = [6, 0], sizes = [1, 128], strides = [1, 1]} : vector<9x128xf32> to vector<1x128xf32>
      %101 = vector.broadcast %100 : vector<1x128xf32> to vector<8x128xf32>
      %102 = arith.mulf %99, %101 : vector<8x128xf32>
      %103 = arith.addf %88, %102 : vector<8x128xf32>
      %104 = vector.extract_strided_slice %45 {offsets = [7, 0], sizes = [1, 128], strides = [1, 1]} : vector<9x128xf32> to vector<1x128xf32>
      %105 = vector.broadcast %104 : vector<1x128xf32> to vector<8x128xf32>
      %106 = arith.mulf %98, %105 : vector<8x128xf32>
      %107 = arith.addf %103, %106 : vector<8x128xf32>
      %c120_i32_30 = arith.constant 120 : i32
      %108 = tpu.dynamic_rotate %98 by %c120_i32_30 dim 1 : vector<8x128xf32>, i32 -> vector<8x128xf32>
      %109 = vector.extract_strided_slice %45 {offsets = [8, 0], sizes = [1, 128], strides = [1, 1]} : vector<9x128xf32> to vector<1x128xf32>
      %110 = vector.broadcast %109 : vector<1x128xf32> to vector<8x128xf32>
      %111 = arith.mulf %108, %110 : vector<8x128xf32>
      %112 = arith.addf %107, %111 : vector<8x128xf32>
      %cst_31 = arith.constant 3.000000e+00 : f32
      %113 = vector.broadcast %cst_31 : f32 to vector<8x128xf32>
      %114 = arith.addf %112, %113 : vector<8x128xf32>
      %cst_32 = arith.constant 0.000000e+00 : f32
      %cst_33 = arith.constant 6.000000e+00 : f32
      %115 = vector.broadcast %cst_32 : f32 to vector<8x128xf32>
      %116 = arith.maximumf %115, %114 : vector<8x128xf32>
      %117 = vector.broadcast %cst_33 : f32 to vector<8x128xf32>
      %118 = arith.minimumf %117, %116 : vector<8x128xf32>
      %119 = arith.mulf %112, %118 : vector<8x128xf32>
      %120 = vector.broadcast %44 : vector<1x128xf32> to vector<8x128xf32>
      %121 = arith.mulf %119, %120 : vector<8x128xf32>
      %cst_34 = arith.constant dense<0.000000e+00> : vector<8x16xf32>
      %122 = tpu.matmul %121, %46, %cst_34 {dimension_numbers = #tpu.dot_dimension_numbers<[1], [0], [0], [1], [0, 0, 1, 1], [], []>} : vector<8x128xf32>, vector<128x16xf32>, vector<8x16xf32> -> vector<8x16xf32>
      %123 = arith.negf %122 : vector<8x16xf32>
      %124 = math.exp %123 : vector<8x16xf32>
      %cst_35 = arith.constant 1.000000e+00 : f32
      %125 = vector.broadcast %cst_35 : f32 to vector<8x16xf32>
      %126 = arith.addf %125, %124 : vector<8x16xf32>
      %127 = arith.divf %125, %126 : vector<8x16xf32>
      %cst_36 = arith.constant 1.000000e+00 : f32
      %128 = vector.broadcast %cst_36 : f32 to vector<8x16xf32>
      %129 = arith.addf %127, %128 : vector<8x16xf32>
      %cst_37 = arith.constant dense<0.000000e+00> : vector<8x128xf32>
      %130 = tpu.matmul %129, %47, %cst_37 {dimension_numbers = #tpu.dot_dimension_numbers<[1], [0], [0], [1], [0, 0, 1, 1], [], []>} : vector<8x16xf32>, vector<16x128xf32>, vector<8x128xf32> -> vector<8x128xf32>
      %131 = arith.mulf %51, %130 : vector<8x128xf32>
      %c0_38 = arith.constant 0 : index
      %132 = arith.index_cast %arg9 : i32 to index
      %c0_39 = arith.constant 0 : index
      %c0_40 = arith.constant 0 : index
      %133 = vector.load %arg8[%c0_38, %132, %c0_39, %c0_40] : memref<1x4x8x128xf32, #tpu.memory_space<vmem>>, vector<1x1x8x128xf32>
      %134 = vector.shape_cast %133 : vector<1x1x8x128xf32> to vector<8x128xf32>
      %135 = vector.shape_cast %131 : vector<8x128xf32> to vector<1x1x8x128xf32>
      tpu.vector_store %arg8[%c0_38, %132, %c0_39, %c0_40], %135 {strides = array<i32>} : memref<1x4x8x128xf32, #tpu.memory_space<vmem>>, vector<1x1x8x128xf32>,
    }
    %c4_i32_15 = arith.constant 4 : i32
    return
  }
  func.func @transform_0(%arg0: i32) -> (i32, i32, i32, i32) {
    %c0_i32 = arith.constant 0 : i32
    %c0_i32_0 = arith.constant 0 : i32
    %c0_i32_1 = arith.constant 0 : i32
    %c0_i32_2 = arith.constant 0 : i32
    return %arg0, %c0_i32, %c0_i32_0, %c0_i32_1 : i32, i32, i32, i32
  }
  func.func @transform_1(%arg0: i32) -> (i32, i32) {
    %c0_i32 = arith.constant 0 : i32
    %c0_i32_0 = arith.constant 0 : i32
    %c0_i32_1 = arith.constant 0 : i32
    return %c0_i32, %c0_i32_0 : i32, i32
  }
  func.func @transform_2(%arg0: i32) -> (i32, i32) {
    %c0_i32 = arith.constant 0 : i32
    %c0_i32_0 = arith.constant 0 : i32
    %c0_i32_1 = arith.constant 0 : i32
    return %c0_i32, %c0_i32_0 : i32, i32
  }
  func.func @transform_3(%arg0: i32) -> (i32, i32) {
    %c0_i32 = arith.constant 0 : i32
    %c0_i32_0 = arith.constant 0 : i32
    %c0_i32_1 = arith.constant 0 : i32
    return %c0_i32, %c0_i32_0 : i32, i32
  }
  func.func @transform_4(%arg0: i32) -> (i32, i32) {
    %c0_i32 = arith.constant 0 : i32
    %c0_i32_0 = arith.constant 0 : i32
    %c0_i32_1 = arith.constant 0 : i32
    return %c0_i32, %c0_i32_0 : i32, i32
  }
  func.func @transform_5(%arg0: i32) -> (i32, i32) {
    %c0_i32 = arith.constant 0 : i32
    %c0_i32_0 = arith.constant 0 : i32
    %c0_i32_1 = arith.constant 0 : i32
    return %c0_i32, %c0_i32_0 : i32, i32
  }
  func.func @transform_6(%arg0: i32) -> (i32, i32) {
    %c0_i32 = arith.constant 0 : i32
    %c0_i32_0 = arith.constant 0 : i32
    %c0_i32_1 = arith.constant 0 : i32
    return %c0_i32, %c0_i32_0 : i32, i32
  }
  func.func @transform_7(%arg0: i32) -> (i32, i32, i32, i32) {
    %c0_i32 = arith.constant 0 : i32
    %c0_i32_0 = arith.constant 0 : i32
    %c0_i32_1 = arith.constant 0 : i32
    %c0_i32_2 = arith.constant 0 : i32
    return %arg0, %c0_i32, %c0_i32_0, %c0_i32_1 : i32, i32, i32, i32
  }
}

</mosaic_0001>

<llo_original>
// kernel: tpu_custom_call.1
$region0: #{tpu_custom_call.1}
  #allocation0 [shape = 'u32[]', space=smem, size = 0x4, offset = 0x4, fixed_abs, tag = 'smem constant byte address 0x4 - core index']
  #allocation1 [shape = 'u32[144,128]{1,0:T(1,128)}', space=vmem, size = 0x12000, scoped, tag = 'internal scratch']
  %s0 = inlined_call_operand.vmem [shape: f32[2,4,8,128], index: 0, kind: input, shape index: {}]
  %s1 = inlined_call_operand.vmem [shape: f32[9,128], index: 1, kind: input, shape index: {}]
  %s2 = inlined_call_operand.vmem [shape: f32[9,128], index: 2, kind: input, shape index: {}]
  %s3 = inlined_call_operand.vmem [shape: f32[15,128], index: 3, kind: input, shape index: {}]
  %s4 = inlined_call_operand.vmem [shape: f32[8,128], index: 4, kind: input, shape index: {}]
  %s5 = inlined_call_operand.vmem [shape: f32[128,16], index: 5, kind: input, shape index: {}]
  %s6 = inlined_call_operand.vmem [shape: f32[16,128], index: 6, kind: input, shape index: {}]
  %s7 = inlined_call_operand.hbm [shape: f32[2,4,8,128], index: 7, kind: output, shape index: {}]
  %s8 = sld [smem:[#allocation0]]
  $region75: #{tpu_custom_call.1} parent=0
    _
  %s10 = ssub.s32 1, %s8
  %s11 = scalar_select 0, %s10, %s8
  $region1: #{tpu_custom_call.1} parent=0
    #allocation2 [shape = 'u8[32768]{0}', space=vmem, size = 0x8000, scoped, tag = 'output window, operand 0']
    #allocation3 [shape = 's32[2]{0}', space=sflag, size = 0x8, scoped, tag = 'scoped memory for tpu_custom_call.1']
    %12 = vsyncpa [#allocation3], 0
    %s13 = scalar_lea.sflag [#allocation3], 1
    %14 = vsyncpa %s13, 0
    loop: start=0, step=1, limit=4
    $region2: #{tpu_custom_call.1} parent=1 // loop_pre_header
      _
    $region3: #{tpu_custom_call.1} parent=1 // loop_header
      %s16 = sphi 0, %s20
      %p17 = scmp.ge.s32.totalorder %s16, 4
      %s26 = sphi 0, %s28
      %s29 = sphi 0, %s26
      %s30 = sphi 0, %s29
      %s46 = sphi 0, %s30
      %s50 = sphi 0, %s50
      %s52 = sphi 0, %s50
      %s53 = sphi 0, %s52
      %s67 = sphi 0, %s53
      %s71 = sphi 0, %s71
      %s73 = sphi 0, %s71
      %s74 = sphi 0, %s73
      %s88 = sphi 0, %s74
      %s92 = sphi 0, %s92
      %s94 = sphi 0, %s92
      %s95 = sphi 0, %s94
      %s109 = sphi 0, %s95
      %s113 = sphi 0, %s113
      %s115 = sphi 0, %s113
      %s116 = sphi 0, %s115
      %s130 = sphi 0, %s116
      %s134 = sphi 0, %s134
      %s136 = sphi 0, %s134
      %s137 = sphi 0, %s136
      %s151 = sphi 0, %s137
      %s155 = sphi 0, %s155
      %s157 = sphi 0, %s155
      %s158 = sphi 0, %s157
      %s172 = sphi 0, %s158
      %s178 = sphi 0, %s180
      %s181 = sphi 0, %s178
      %s182 = sphi 0, %s181
      %s198 = sphi 0, %s182
    $region4: #{tpu_custom_call.1} parent=1 // loop_header_branch
      %19 = sbr.rel (%p17) target = $region8
    $region5: #{tpu_custom_call.1} parent=1 // loop_body
      %s21 = ssub.s32 %s16, 1
      %s22 = ssub.s32 %s16, 2
      %s23 = sadd.s32 %s16, 1
      %s24 = ssub.s32 %s16, %s23
      %p25 = scmp.eq.s32.totalorder %s24, 0
      %s27 = sadd.s32 %s26, 1
      %s28 = scalar_select %p25, %s26, %s27
      %p31 = pneg %p25
      %p32 = scmp.eq.s32.totalorder %s16, 1
      %p33 = por %p31, %p32
      %p34 = scmp.ne.s32.totalorder %s26, %s29
      %p35 = scmp.eq.s32.totalorder %s16, 0
      %p36 = por %p34, %p35
      %p37 = scmp.ne.s32.totalorder %s26, %s29
      %p38 = scmp.eq.s32.totalorder %s21, 1
      %p39 = por %p37, %p38
      %p40 = scmp.ne.s32.totalorder %s29, %s30
      %p41 = scmp.eq.s32.totalorder %s21, 0
      %p42 = por %p40, %p41
      %p43 = scmp.ne.s32.totalorder %s29, %s30
      %p44 = scmp.eq.s32.totalorder %s22, 1
      %p45 = por %p43, %p44
      %p47 = scmp.ne.s32.totalorder %s30, %s46
      %p48 = scmp.eq.s32.totalorder %s22, 0
      %p49 = por %p47, %p48
      %s51 = sadd.s32 %s50, 1
      %p54 = scmp.eq.s32.totalorder %s16, 1
      %p55 = scmp.ne.s32.totalorder %s50, %s52
      %p56 = scmp.eq.s32.totalorder %s16, 0
      %p57 = por %p55, %p56
      %p58 = scmp.ne.s32.totalorder %s50, %s52
      %p59 = scmp.eq.s32.totalorder %s21, 1
      %p60 = por %p58, %p59
      %p61 = scmp.ne.s32.totalorder %s52, %s53
      %p62 = scmp.eq.s32.totalorder %s21, 0
      %p63 = por %p61, %p62
      %p64 = scmp.ne.s32.totalorder %s52, %s53
      %p65 = scmp.eq.s32.totalorder %s22, 1
      %p66 = por %p64, %p65
      %p68 = scmp.ne.s32.totalorder %s53, %s67
      %p69 = scmp.eq.s32.totalorder %s22, 0
      %p70 = por %p68, %p69
      %s72 = sadd.s32 %s71, 1
      %p75 = scmp.eq.s32.totalorder %s16, 1
      %p76 = scmp.ne.s32.totalorder %s71, %s73
      %p77 = scmp.eq.s32.totalorder %s16, 0
      %p78 = por %p76, %p77
      %p79 = scmp.ne.s32.totalorder %s71, %s73
      %p80 = scmp.eq.s32.totalorder %s21, 1
      %p81 = por %p79, %p80
      %p82 = scmp.ne.s32.totalorder %s73, %s74
      %p83 = scmp.eq.s32.totalorder %s21, 0
      %p84 = por %p82, %p83
      %p85 = scmp.ne.s32.totalorder %s73, %s74
      %p86 = scmp.eq.s32.totalorder %s22, 1
      %p87 = por %p85, %p86
      %p89 = scmp.ne.s32.totalorder %s74, %s88
      %p90 = scmp.eq.s32.totalorder %s22, 0
      %p91 = por %p89, %p90
      %s93 = sadd.s32 %s92, 1
      %p96 = scmp.eq.s32.totalorder %s16, 1
      %p97 = scmp.ne.s32.totalorder %s92, %s94
      %p98 = scmp.eq.s32.totalorder %s16, 0
      %p99 = por %p97, %p98
      %p100 = scmp.ne.s32.totalorder %s92, %s94
      %p101 = scmp.eq.s32.totalorder %s21, 1
      %p102 = por %p100, %p101
      %p103 = scmp.ne.s32.totalorder %s94, %s95
      %p104 = scmp.eq.s32.totalorder %s21, 0
      %p105 = por %p103, %p104
      %p106 = scmp.ne.s32.totalorder %s94, %s95
      %p107 = scmp.eq.s32.totalorder %s22, 1
      %p108 = por %p106, %p107
      %p110 = scmp.ne.s32.totalorder %s95, %s109
      %p111 = scmp.eq.s32.totalorder %s22, 0
      %p112 = por %p110, %p111
      %s114 = sadd.s32 %s113, 1
      %p117 = scmp.eq.s32.totalorder %s16, 1
      %p118 = scmp.ne.s32.totalorder %s113, %s115
      %p119 = scmp.eq.s32.totalorder %s16, 0
      %p120 = por %p118, %p119
      %p121 = scmp.ne.s32.totalorder %s113, %s115
      %p122 = scmp.eq.s32.totalorder %s21, 1
      %p123 = por %p121, %p122
      %p124 = scmp.ne.s32.totalorder %s115, %s116
      %p125 = scmp.eq.s32.totalorder %s21, 0
      %p126 = por %p124, %p125
      %p127 = scmp.ne.s32.totalorder %s115, %s116
      %p128 = scmp.eq.s32.totalorder %s22, 1
      %p129 = por %p127, %p128
      %p131 = scmp.ne.s32.totalorder %s116, %s130
      %p132 = scmp.eq.s32.totalorder %s22, 0
      %p133 = por %p131, %p132
      %s135 = sadd.s32 %s134, 1
      %p138 = scmp.eq.s32.totalorder %s16, 1
      %p139 = scmp.ne.s32.totalorder %s134, %s136
      %p140 = scmp.eq.s32.totalorder %s16, 0
      %p141 = por %p139, %p140
      %p142 = scmp.ne.s32.totalorder %s134, %s136
      %p143 = scmp.eq.s32.totalorder %s21, 1
      %p144 = por %p142, %p143
      %p145 = scmp.ne.s32.totalorder %s136, %s137
      %p146 = scmp.eq.s32.totalorder %s21, 0
      %p147 = por %p145, %p146
      %p148 = scmp.ne.s32.totalorder %s136, %s137
      %p149 = scmp.eq.s32.totalorder %s22, 1
      %p150 = por %p148, %p149
      %p152 = scmp.ne.s32.totalorder %s137, %s151
      %p153 = scmp.eq.s32.totalorder %s22, 0
      %p154 = por %p152, %p153
      %s156 = sadd.s32 %s155, 1
      %p159 = scmp.eq.s32.totalorder %s16, 1
      %p160 = scmp.ne.s32.totalorder %s155, %s157
      %p161 = scmp.eq.s32.totalorder %s16, 0
      %p162 = por %p160, %p161
      %p163 = scmp.ne.s32.totalorder %s155, %s157
      %p164 = scmp.eq.s32.totalorder %s21, 1
      %p165 = por %p163, %p164
      %p166 = scmp.ne.s32.totalorder %s157, %s158
      %p167 = scmp.eq.s32.totalorder %s21, 0
      %p168 = por %p166, %p167
      %p169 = scmp.ne.s32.totalorder %s157, %s158
      %p170 = scmp.eq.s32.totalorder %s22, 1
      %p171 = por %p169, %p170
      %p173 = scmp.ne.s32.totalorder %s158, %s172
      %p174 = scmp.eq.s32.totalorder %s22, 0
      %p175 = por %p173, %p174
      %s176 = ssub.s32 %s16, %s23
      %p177 = scmp.eq.s32.totalorder %s176, 0
      %s179 = sadd.s32 %s178, 1
      %s180 = scalar_select %p177, %s178, %s179
      %p183 = pneg %p177
      %p184 = scmp.eq.s32.totalorder %s16, 1
      %p185 = por %p183, %p184
      %p186 = scmp.ne.s32.totalorder %s178, %s181
      %p187 = scmp.eq.s32.totalorder %s16, 0
      %p188 = por %p186, %p187
      %p189 = scmp.ne.s32.totalorder %s178, %s181
      %p190 = scmp.eq.s32.totalorder %s21, 1
      %p191 = por %p189, %p190
      %p192 = scmp.ne.s32.totalorder %s181, %s182
      %p193 = scmp.eq.s32.totalorder %s21, 0
      %p194 = por %p192, %p193
      %p195 = scmp.ne.s32.totalorder %s181, %s182
      %p196 = scmp.eq.s32.totalorder %s22, 1
      %p197 = por %p195, %p196
      %p199 = scmp.ne.s32.totalorder %s182, %s198
      %p200 = scmp.eq.s32.totalorder %s22, 0
      %p201 = por %p199, %p200
      %p202 = scmp.le.s32.totalorder 1, %s16
      %p203 = scmp.lt.s32.totalorder %s16, 3
      %p204 = pnand %p202, %p203
      %p205 = pneg %p204
      // Predicated region
      $region9: #{tpu_custom_call.1} parent=5 // pred_check
        _
      $region10: #{tpu_custom_call.1} parent=5 // pred_check_branch
        %207 = sbr.rel (%p204) target = $region12
      $region11: #{tpu_custom_call.1} parent=5 // pred_region
        %s208 = ssub.s32 %s16, 1
        // Predicated region
        $region13: #{tpu_custom_call.1} parent=11 // pred_check
          %p209 = pneg %p63
        $region14: #{tpu_custom_call.1} parent=11 // pred_check_branch
          %211 = sbr.rel (%p209) target = $region16
        $region15: #{tpu_custom_call.1} parent=11 // pred_region
          _
        $region16: #{tpu_custom_call.1} parent=11 // pred_fallthru
          _
        // Predicated region
        $region17: #{tpu_custom_call.1} parent=11 // pred_check
          %p212 = pneg %p84
        $region18: #{tpu_custom_call.1} parent=11 // pred_check_branch
          %214 = sbr.rel (%p212) target = $region20
        $region19: #{tpu_custom_call.1} parent=11 // pred_region
          _
        $region20: #{tpu_custom_call.1} parent=11 // pred_fallthru
          _
        // Predicated region
        $region21: #{tpu_custom_call.1} parent=11 // pred_check
          %p215 = pneg %p105
        $region22: #{tpu_custom_call.1} parent=11 // pred_check_branch
          %217 = sbr.rel (%p215) target = $region24
        $region23: #{tpu_custom_call.1} parent=11 // pred_region
          _
        $region24: #{tpu_custom_call.1} parent=11 // pred_fallthru
          _
        // Predicated region
        $region25: #{tpu_custom_call.1} parent=11 // pred_check
          %p218 = pneg %p126
        $region26: #{tpu_custom_call.1} parent=11 // pred_check_branch
          %220 = sbr.rel (%p218) target = $region28
        $region27: #{tpu_custom_call.1} parent=11 // pred_region
          _
        $region28: #{tpu_custom_call.1} parent=11 // pred_fallthru
          _
        // Predicated region
        $region29: #{tpu_custom_call.1} parent=11 // pred_check
          %p221 = pneg %p147
        $region30: #{tpu_custom_call.1} parent=11 // pred_check_branch
          %223 = sbr.rel (%p221) target = $region32
        $region31: #{tpu_custom_call.1} parent=11 // pred_region
          _
        $region32: #{tpu_custom_call.1} parent=11 // pred_fallthru
          _
        // Predicated region
        $region33: #{tpu_custom_call.1} parent=11 // pred_check
          %p224 = pneg %p168
        $region34: #{tpu_custom_call.1} parent=11 // pred_check_branch
          %226 = sbr.rel (%p224) target = $region36
        $region35: #{tpu_custom_call.1} parent=11 // pred_region
          _
        $region36: #{tpu_custom_call.1} parent=11 // pred_fallthru
          _
      $region12: #{tpu_custom_call.1} parent=5 // pred_fallthru
        _
      %p227 = scmp.lt.s32.totalorder %s16, 2
      // Predicated region
      $region37: #{tpu_custom_call.1} parent=5 // pred_check
        %p228 = pneg %p227
      $region38: #{tpu_custom_call.1} parent=5 // pred_check_branch
        %230 = sbr.rel (%p228) target = $region40
      $region39: #{tpu_custom_call.1} parent=5 // pred_region
        // Predicated region
        $region41: #{tpu_custom_call.1} parent=39 // pred_check
          %p231 = pneg %p36
        $region42: #{tpu_custom_call.1} parent=39 // pred_check_branch
          %233 = sbr.rel (%p231) target = $region44
        $region43: #{tpu_custom_call.1} parent=39 // pred_region
          %p234 = scmp.lt.s32.totalorder %s16, 1
          %s235 = scalar_select %p234, %s16, 1
          %s236 = smul.addr %s235, 4
          %s237 = smul.addr %s236, 8
          %s238 = scalar_lea.vmem %s0, %s237
        $region44: #{tpu_custom_call.1} parent=39 // pred_fallthru
          _
      $region40: #{tpu_custom_call.1} parent=5 // pred_fallthru
        _
      %p239 = scmp.le.s32.totalorder 1, %s16
      %p240 = scmp.lt.s32.totalorder %s16, 3
      %p241 = pnand %p239, %p240
      %p242 = pneg %p241
      // Predicated region
      $region45: #{tpu_custom_call.1} parent=5 // pred_check
        _
      $region46: #{tpu_custom_call.1} parent=5 // pred_check_branch
        %244 = sbr.rel (%p241) target = $region48
      $region47: #{tpu_custom_call.1} parent=5 // pred_region
        %s245 = ssub.s32 %s16, 1
        %p246 = scmp.lt.s32.totalorder %s21, 1
        %s247 = scalar_select %p246, %s21, 1
        %s248 = smul.addr %s247, 4
        %s249 = smul.addr %s248, 8
        %s250 = scalar_lea.vmem %s0, %s249
        %p251 = pneg %p42
        %p252 = pneg %p39
        %p253 = pneg %p63
        %p254 = pneg %p60
        %p255 = pneg %p84
        %p256 = pneg %p81
        %p257 = pneg %p105
        %p258 = pneg %p102
        %p259 = pneg %p126
        %p260 = pneg %p123
        %p261 = pneg %p147
        %p262 = pneg %p144
        %p263 = pneg %p168
        %p264 = pneg %p165
        %p265 = pneg %p194
        %p266 = pneg %p191
        %s267 = sand.u32 %s181, 1
        %s268 = scalar_lea.sflag [#allocation3], %s267
        %s269 = sand.u32 %s181, 1
        %s270 = smul.addr %s269, 32
        %s271 = scalar_lea.vmem [#allocation2], %s270
        %p272 = scmp.lt.s32.totalorder %s21, 1
        %s273 = scalar_select %p272, %s21, 1
        %s274 = smul.addr %s273, 4
        %s275 = smul.addr %s274, 8
        %s276 = scalar_lea.vmem %s0, %s275
        %v277 = vlaneseq
        %v278 = vshrl.u32 %v277, 7
        %v279 = vld [vmem:[%s1] sm:$0xff]
        %v280 = vld [vmem:[%s1 + $0x8] sm:$0x1]
        %v281 = vld [vmem:[%s3] sm:$0xff]
        %v282 = vld [vmem:[%s3 + $0x8] sm:$0x7f]
        loop: start=0, step=1, limit=4
        $region49: #{tpu_custom_call.1} parent=47 // loop_pre_header
          _
        $region50: #{tpu_custom_call.1} parent=47 // loop_header
          %s284 = sphi 0, %s288
          %p285 = scmp.ge.s32.totalorder %s284, 4
          %v289 = vphi -inf, %v499
        $region51: #{tpu_custom_call.1} parent=47 // loop_header_branch
          %287 = sbr.rel (%p285) target = $region55
        $region52: #{tpu_custom_call.1} parent=47 // loop_body
          %s290 = smul.u32 %s284, 8
          %s291 = scalar_lea.vmem %s276, %s290
          %v292 = vld [vmem:[%s291] sm:$0xff]
          %v293 = vrot.slane %v292, 7
          %vm294 = vcmp.ge.s32.totalorder %v278, 1
          %vm295 = vcmp.lt.s32.totalorder %v278, 8
          %vm296 = vmand %vm294, %vm295
          %v297 = vsel %vm296, 1, 0
          %vm298 = vcmp.eq.s32.totalorder %v297, 1
          %v299 = vsel %vm298, %v293, 0.0
          %300 = vrot.lane.b32.xlu0 %v299, 8
          %v301 = vpop.permute.xlu0 %300
          %v302 = vlaneseq
          %v303 = vshrl.u32 %v302, 7
          %v304 = vsub.s32 0, %v303
          %v305 = vrot.slane %v279, %v304
          %v306 = vmul.f32 %v301, %v305
          %v307 = vlaneseq
          %v308 = vshrl.u32 %v307, 7
          %v309 = vsub.s32 1, %v308
          %v310 = vrot.slane %v279, %v309
          %v311 = vmul.f32 %v299, %v310
          %v312 = vadd.f32 %v306, %v311
          %313 = vrot.lane.b32.xlu0 %v299, 120
          %v314 = vpop.permute.xlu0 %313
          %v315 = vlaneseq
          %v316 = vshrl.u32 %v315, 7
          %v317 = vsub.s32 2, %v316
          %v318 = vrot.slane %v279, %v317
          %v319 = vmul.f32 %v314, %v318
          %v320 = vadd.f32 %v312, %v319
          %321 = vrot.lane.b32.xlu0 %v292, 8
          %v322 = vpop.permute.xlu0 %321
          %v323 = vlaneseq
          %v324 = vshrl.u32 %v323, 7
          %v325 = vsub.s32 3, %v324
          %v326 = vrot.slane %v279, %v325
          %v327 = vmul.f32 %v322, %v326
          %v328 = vadd.f32 %v320, %v327
          %v329 = vlaneseq
          %v330 = vshrl.u32 %v329, 7
          %v331 = vsub.s32 4, %v330
          %v332 = vrot.slane %v279, %v331
          %v333 = vmul.f32 %v292, %v332
          %v334 = vadd.f32 %v328, %v333
          %335 = vrot.lane.b32.xlu0 %v292, 120
          %v336 = vpop.permute.xlu0 %335
          %v337 = vlaneseq
          %v338 = vshrl.u32 %v337, 7
          %v339 = vsub.s32 5, %v338
          %v340 = vrot.slane %v279, %v339
          %v341 = vmul.f32 %v336, %v340
          %v342 = vadd.f32 %v334, %v341
          %v343 = vrot.slane %v292, 1
          %vm344 = vcmp.ge.s32.totalorder %v278, 0
          %vm345 = vcmp.lt.s32.totalorder %v278, 7
          %vm346 = vmand %vm344, %vm345
          %v347 = vsel %vm346, 1, 0
          %vm348 = vcmp.eq.s32.totalorder %v347, 1
          %v349 = vsel %vm348, %v343, 0.0
          %350 = vrot.lane.b32.xlu0 %v349, 8
          %v351 = vpop.permute.xlu0 %350
          %v352 = vlaneseq
          %v353 = vshrl.u32 %v352, 7
          %v354 = vsub.s32 6, %v353
          %v355 = vrot.slane %v279, %v354
          %v356 = vmul.f32 %v351, %v355
          %v357 = vadd.f32 %v342, %v356
          %v358 = vlaneseq
          %v359 = vshrl.u32 %v358, 7
          %v360 = vsub.s32 7, %v359
          %v361 = vrot.slane %v279, %v360
          %v362 = vmul.f32 %v349, %v361
          %v363 = vadd.f32 %v357, %v362
          %364 = vrot.lane.b32.xlu0 %v349, 120
          %v365 = vpop.permute.xlu0 %364
          %v366 = vlaneseq
          %v367 = vshrl.u32 %v366, 7
          %v368 = vsub.s32 0, %v367
          %v369 = vrot.slane %v280, %v368
          %v370 = vmul.f32 %v365, %v369
          %v371 = vadd.f32 %v363, %v370
          %v372 = vadd.f32 %v371, 3.0
          %v373 = vmax.f32 %v372, 0.0
          %v374 = vmin.f32 %v373, 6.0
          %v375 = vmul.f32 %v371, %v374
          %376 = vrot.lane.b32.xlu0 %v375, 7
          %v377 = vpop.permute.xlu0 %376
          %v378 = vlaneseq
          %v379 = vshrl.u32 %v378, 7
          %v380 = vsub.s32 0, %v379
          %v381 = vrot.slane %v281, %v380
          %v382 = vmul.f32 %v377, %v381
          %383 = vrot.lane.b32.xlu0 %v375, 6
          %v384 = vpop.permute.xlu0 %383
          %v385 = vlaneseq
          %v386 = vshrl.u32 %v385, 7
          %v387 = vsub.s32 1, %v386
          %v388 = vrot.slane %v281, %v387
          %v389 = vmul.f32 %v384, %v388
          %v390 = vadd.f32 %v382, %v389
          %391 = vrot.lane.b32.xlu0 %v375, 5
          %v392 = vpop.permute.xlu0 %391
          %v393 = vlaneseq
          %v394 = vshrl.u32 %v393, 7
          %v395 = vsub.s32 2, %v394
          %v396 = vrot.slane %v281, %v395
          %v397 = vmul.f32 %v392, %v396
          %v398 = vadd.f32 %v390, %v397
          %399 = vrot.lane.b32.xlu0 %v375, 4
          %v400 = vpop.permute.xlu0 %399
          %v401 = vlaneseq
          %v402 = vshrl.u32 %v401, 7
          %v403 = vsub.s32 3, %v402
          %v404 = vrot.slane %v281, %v403
          %v405 = vmul.f32 %v400, %v404
          %v406 = vadd.f32 %v398, %v405
          %407 = vrot.lane.b32.xlu0 %v375, 3
          %v408 = vpop.permute.xlu0 %407
          %v409 = vlaneseq
          %v410 = vshrl.u32 %v409, 7
          %v411 = vsub.s32 4, %v410
          %v412 = vrot.slane %v281, %v411
          %v413 = vmul.f32 %v408, %v412
          %v414 = vadd.f32 %v406, %v413
          %415 = vrot.lane.b32.xlu0 %v375, 2
          %v416 = vpop.permute.xlu0 %415
          %v417 = vlaneseq
          %v418 = vshrl.u32 %v417, 7
          %v419 = vsub.s32 5, %v418
          %v420 = vrot.slane %v281, %v419
          %v421 = vmul.f32 %v416, %v420
          %v422 = vadd.f32 %v414, %v421
          %423 = vrot.lane.b32.xlu0 %v375, 1
          %v424 = vpop.permute.xlu0 %423
          %v425 = vlaneseq
          %v426 = vshrl.u32 %v425, 7
          %v427 = vsub.s32 6, %v426
          %v428 = vrot.slane %v281, %v427
          %v429 = vmul.f32 %v424, %v428
          %v430 = vadd.f32 %v422, %v429
          %v431 = vlaneseq
          %v432 = vshrl.u32 %v431, 7
          %v433 = vsub.s32 7, %v432
          %v434 = vrot.slane %v281, %v433
          %v435 = vmul.f32 %v375, %v434
          %v436 = vadd.f32 %v430, %v435
          %437 = vrot.lane.b32.xlu0 %v375, 127
          %v438 = vpop.permute.xlu0 %437
          %v439 = vlaneseq
          %v440 = vshrl.u32 %v439, 7
          %v441 = vsub.s32 0, %v440
          %v442 = vrot.slane %v282, %v441
          %v443 = vmul.f32 %v438, %v442
          %v444 = vadd.f32 %v436, %v443
          %445 = vrot.lane.b32.xlu0 %v375, 126
          %v446 = vpop.permute.xlu0 %445
          %v447 = vlaneseq
          %v448 = vshrl.u32 %v447, 7
          %v449 = vsub.s32 1, %v448
          %v450 = vrot.slane %v282, %v449
          %v451 = vmul.f32 %v446, %v450
          %v452 = vadd.f32 %v444, %v451
          %453 = vrot.lane.b32.xlu0 %v375, 125
          %v454 = vpop.permute.xlu0 %453
          %v455 = vlaneseq
          %v456 = vshrl.u32 %v455, 7
          %v457 = vsub.s32 2, %v456
          %v458 = vrot.slane %v282, %v457
          %v459 = vmul.f32 %v454, %v458
          %v460 = vadd.f32 %v452, %v459
          %461 = vrot.lane.b32.xlu0 %v375, 124
          %v462 = vpop.permute.xlu0 %461
          %v463 = vlaneseq
          %v464 = vshrl.u32 %v463, 7
          %v465 = vsub.s32 3, %v464
          %v466 = vrot.slane %v282, %v465
          %v467 = vmul.f32 %v462, %v466
          %v468 = vadd.f32 %v460, %v467
          %469 = vrot.lane.b32.xlu0 %v375, 123
          %v470 = vpop.permute.xlu0 %469
          %v471 = vlaneseq
          %v472 = vshrl.u32 %v471, 7
          %v473 = vsub.s32 4, %v472
          %v474 = vrot.slane %v282, %v473
          %v475 = vmul.f32 %v470, %v474
          %v476 = vadd.f32 %v468, %v475
          %477 = vrot.lane.b32.xlu0 %v375, 122
          %v478 = vpop.permute.xlu0 %477
          %v479 = vlaneseq
          %v480 = vshrl.u32 %v479, 7
          %v481 = vsub.s32 5, %v480
          %v482 = vrot.slane %v282, %v481
          %v483 = vmul.f32 %v478, %v482
          %v484 = vadd.f32 %v476, %v483
          %485 = vrot.lane.b32.xlu0 %v375, 121
          %v486 = vpop.permute.xlu0 %485
          %v487 = vlaneseq
          %v488 = vshrl.u32 %v487, 7
          %v489 = vsub.s32 6, %v488
          %v490 = vrot.slane %v282, %v489
          %v491 = vmul.f32 %v486, %v490
          %v492 = vadd.f32 %v484, %v491
          %v493 = vrot.slane %v492, 4
          %v494 = vmax.f32 %v492, %v493
          %v495 = vrot.slane %v494, 2
          %v496 = vmax.f32 %v494, %v495
          %v497 = vrot.slane %v496, 1
          %v498 = vmax.f32 %v496, %v497
          %v499 = vmax.f32 %v289, %v498
        $region53: #{tpu_custom_call.1} parent=47 // loop_footer
          %s288 = sadd.s32 1, %s284
        $region54: #{tpu_custom_call.1} parent=47 // loop_footer_branch
          %283 = sbr.rel target = $region50
        $region55: #{tpu_custom_call.1} parent=47 // loop_exit
          _
        %500 = vrot.lane.b32.xlu0 %v289, 8
        %v501 = vpop.permute.xlu0 %500
        %v502 = vmax.f32 %v289, %v501
        %503 = vrot.lane.b32.xlu0 %v502, 16
        %v504 = vpop.permute.xlu0 %503
        %v505 = vmax.f32 %v502, %v504
        %506 = vrot.lane.b32.xlu0 %v505, 32
        %v507 = vpop.permute.xlu0 %506
        %v508 = vmax.f32 %v505, %v507
        %509 = vrot.lane.b32.xlu0 %v508, 64
        %v510 = vpop.permute.xlu0 %509
        %v511 = vmax.f32 %v508, %v510
        %v512 = vld [vmem:[%s4] sm:$0xff]
        %v513 = vmul.f32 %v511, %v512
        %514 = vrot.lane.b32.xlu0 %v511, 127
        %v515 = vpop.permute.xlu0 %514
        %v517 = vrot.slane %v512, 1
        %v519 = vmul.f32 %v515, %v517
        %v520 = vadd.f32 %v513, %v519
        %521 = vrot.lane.b32.xlu0 %v511, 126
        %v522 = vpop.permute.xlu0 %521
        %v523 = vrot.slane %v512, 2
        %v525 = vmul.f32 %v522, %v523
        %v526 = vadd.f32 %v520, %v525
        %527 = vrot.lane.b32.xlu0 %v511, 125
        %v528 = vpop.permute.xlu0 %527
        %v529 = vrot.slane %v512, 3
        %v531 = vmul.f32 %v528, %v529
        %v532 = vadd.f32 %v526, %v531
        %533 = vrot.lane.b32.xlu0 %v511, 124
        %v534 = vpop.permute.xlu0 %533
        %v535 = vrot.slane %v512, 4
        %v537 = vmul.f32 %v534, %v535
        %v538 = vadd.f32 %v532, %v537
        %539 = vrot.lane.b32.xlu0 %v511, 123
        %v540 = vpop.permute.xlu0 %539
        %v541 = vrot.slane %v512, 5
        %v543 = vmul.f32 %v540, %v541
        %v544 = vadd.f32 %v538, %v543
        %545 = vrot.lane.b32.xlu0 %v511, 122
        %v546 = vpop.permute.xlu0 %545
        %v547 = vrot.slane %v512, 6
        %v549 = vmul.f32 %v546, %v547
        %v550 = vadd.f32 %v544, %v549
        %551 = vrot.lane.b32.xlu0 %v511, 121
        %v552 = vpop.permute.xlu0 %551
        %v553 = vrot.slane %v512, 7
        %v555 = vmul.f32 %v552, %v553
        %v556 = vadd.f32 %v550, %v555
        %v557 = vld [vmem:[%s2] sm:$0xff]
        %v558 = vld [vmem:[%s2 + $0x8] sm:$0x1]
        %v559 = vld [vmem:[%s5] sm:$0xff]
        %v560 = vld [vmem:[%s5 + $0x8] sm:$0xff]
        %v561 = vld [vmem:[%s5 + $0x10] sm:$0xff]
        %v562 = vld [vmem:[%s5 + $0x18] sm:$0xff]
        %v563 = vld [vmem:[%s5 + $0x20] sm:$0xff]
        %v564 = vld [vmem:[%s5 + $0x28] sm:$0xff]
        %v565 = vld [vmem:[%s5 + $0x30] sm:$0xff]
        %v566 = vld [vmem:[%s5 + $0x38] sm:$0xff]
        %v567 = vld [vmem:[%s5 + $0x40] sm:$0xff]
        %v568 = vld [vmem:[%s5 + $0x48] sm:$0xff]
        %v569 = vld [vmem:[%s5 + $0x50] sm:$0xff]
        %v570 = vld [vmem:[%s5 + $0x58] sm:$0xff]
        %v571 = vld [vmem:[%s5 + $0x60] sm:$0xff]
        %v572 = vld [vmem:[%s5 + $0x68] sm:$0xff]
        %v573 = vld [vmem:[%s5 + $0x70] sm:$0xff]
        %v574 = vld [vmem:[%s5 + $0x78] sm:$0xff]
        %v575 = vld [vmem:[%s6] sm:$0xff]
        %v576 = vld [vmem:[%s6 + $0x8] sm:$0xff]
        loop: start=0, step=1, limit=4
        $region56: #{tpu_custom_call.1} parent=47 // loop_pre_header
          _
        $region57: #{tpu_custom_call.1} parent=47 // loop_header
          %s578 = sphi 0, %s582
          %p579 = scmp.ge.s32.totalorder %s578, 4
        $region58: #{tpu_custom_call.1} parent=47 // loop_header_branch
          %581 = sbr.rel (%p579) target = $region62
        $region59: #{tpu_custom_call.1} parent=47 // loop_body
          %s583 = smul.u32 %s578, 8
          %s584 = scalar_lea.vmem %s276, %s583
          %v585 = vld [vmem:[%s584] sm:$0xff]
          %v586 = vrot.slane %v585, 7
          %vm587 = vcmp.ge.s32.totalorder %v278, 1
          %vm588 = vcmp.lt.s32.totalorder %v278, 8
          %vm589 = vmand %vm587, %vm588
          %v590 = vsel %vm589, 1, 0
          %vm591 = vcmp.eq.s32.totalorder %v590, 1
          %v592 = vsel %vm591, %v586, 0.0
          %593 = vrot.lane.b32.xlu0 %v592, 8
          %v594 = vpop.permute.xlu0 %593
          %v595 = vlaneseq
          %v596 = vshrl.u32 %v595, 7
          %v597 = vsub.s32 0, %v596
          %v598 = vrot.slane %v557, %v597
          %v599 = vmul.f32 %v594, %v598
          %v600 = vlaneseq
          %v601 = vshrl.u32 %v600, 7
          %v602 = vsub.s32 1, %v601
          %v603 = vrot.slane %v557, %v602
          %v604 = vmul.f32 %v592, %v603
          %v605 = vadd.f32 %v599, %v604
          %606 = vrot.lane.b32.xlu0 %v592, 120
          %v607 = vpop.permute.xlu0 %606
          %v608 = vlaneseq
          %v609 = vshrl.u32 %v608, 7
          %v610 = vsub.s32 2, %v609
          %v611 = vrot.slane %v557, %v610
          %v612 = vmul.f32 %v607, %v611
          %v613 = vadd.f32 %v605, %v612
          %614 = vrot.lane.b32.xlu0 %v585, 8
          %v615 = vpop.permute.xlu0 %614
          %v616 = vlaneseq
          %v617 = vshrl.u32 %v616, 7
          %v618 = vsub.s32 3, %v617
          %v619 = vrot.slane %v557, %v618
          %v620 = vmul.f32 %v615, %v619
          %v621 = vadd.f32 %v613, %v620
          %v622 = vlaneseq
          %v623 = vshrl.u32 %v622, 7
          %v624 = vsub.s32 4, %v623
          %v625 = vrot.slane %v557, %v624
          %v626 = vmul.f32 %v585, %v625
          %v627 = vadd.f32 %v621, %v626
          %628 = vrot.lane.b32.xlu0 %v585, 120
          %v629 = vpop.permute.xlu0 %628
          %v630 = vlaneseq
          %v631 = vshrl.u32 %v630, 7
          %v632 = vsub.s32 5, %v631
          %v633 = vrot.slane %v557, %v632
          %v634 = vmul.f32 %v629, %v633
          %v635 = vadd.f32 %v627, %v634
          %v636 = vrot.slane %v585, 1
          %vm637 = vcmp.ge.s32.totalorder %v278, 0
          %vm638 = vcmp.lt.s32.totalorder %v278, 7
          %vm639 = vmand %vm637, %vm638
          %v640 = vsel %vm639, 1, 0
          %vm641 = vcmp.eq.s32.totalorder %v640, 1
          %v642 = vsel %vm641, %v636, 0.0
          %643 = vrot.lane.b32.xlu0 %v642, 8
          %v644 = vpop.permute.xlu0 %643
          %v645 = vlaneseq
          %v646 = vshrl.u32 %v645, 7
          %v647 = vsub.s32 6, %v646
          %v648 = vrot.slane %v557, %v647
          %v649 = vmul.f32 %v644, %v648
          %v650 = vadd.f32 %v635, %v649
          %v651 = vlaneseq
          %v652 = vshrl.u32 %v651, 7
          %v653 = vsub.s32 7, %v652
          %v654 = vrot.slane %v557, %v653
          %v655 = vmul.f32 %v642, %v654
          %v656 = vadd.f32 %v650, %v655
          %657 = vrot.lane.b32.xlu0 %v642, 120
          %v658 = vpop.permute.xlu0 %657
          %v659 = vlaneseq
          %v660 = vshrl.u32 %v659, 7
          %v661 = vsub.s32 0, %v660
          %v662 = vrot.slane %v558, %v661
          %v663 = vmul.f32 %v658, %v662
          %v664 = vadd.f32 %v656, %v663
          %v665 = vadd.f32 %v664, 3.0
          %v666 = vmax.f32 %v665, 0.0
          %v667 = vmin.f32 %v666, 6.0
          %v668 = vmul.f32 %v664, %v667
          %v669 = vlaneseq
          %v670 = vshrl.u32 %v669, 7
          %v671 = vsub.s32 0, %v670
          %v672 = vrot.slane %v556, %v671
          %v673 = vmul.f32 %v668, %v672
          %674 = vmatprep.subr.mxu0 0.0
          %675 = vmatpush1.msra.mxu0 %v559
          %676 = vmatprep.subr.mxu0 0.0
          %677 = vmatpush1.msra.mxu0 %v560
          %678 = vmatprep.subr.mxu0 0.0
          %679 = vmatpush1.msra.mxu0 %v561
          %680 = vmatprep.subr.mxu0 0.0
          %681 = vmatpush1.msra.mxu0 %v562
          %682 = vmatprep.subr.mxu0 0.0
          %683 = vmatpush1.msra.mxu0 %v563
          %684 = vmatprep.subr.mxu0 0.0
          %685 = vmatpush1.msra.mxu0 %v564
          %686 = vmatprep.subr.mxu0 0.0
          %687 = vmatpush1.msra.mxu0 %v565
          %688 = vmatprep.subr.mxu0 0.0
          %689 = vmatpush1.msra.mxu0 %v566
          %690 = vmatprep.subr.mxu0 0.0
          %691 = vmatpush1.msra.mxu0 %v567
          %692 = vmatprep.subr.mxu0 0.0
          %693 = vmatpush1.msra.mxu0 %v568
          %694 = vmatprep.subr.mxu0 0.0
          %695 = vmatpush1.msra.mxu0 %v569
          %696 = vmatprep.subr.mxu0 0.0
          %697 = vmatpush1.msra.mxu0 %v570
          %698 = vmatprep.subr.mxu0 0.0
          %699 = vmatpush1.msra.mxu0 %v571
          %700 = vmatprep.subr.mxu0 0.0
          %701 = vmatpush1.msra.mxu0 %v572
          %702 = vmatprep.subr.mxu0 0.0
          %703 = vmatpush1.msra.mxu0 %v573
          %704 = vmatprep.subr.mxu0 0.0
          %705 = vmatpush1.msra.mxu0 %v574
          %706 = vmatprep.subr.mxu0 0.0
          %707 = vmatpush1.msra.mxu0 0.0
          %708 = vmatprep.subr.mxu0 0.0
          %709 = vmatpush1.msra.mxu0 0.0
          %710 = vmatprep.subr.mxu0 0.0
          %711 = vmatpush1.msra.mxu0 0.0
          %712 = vmatprep.subr.mxu0 0.0
          %713 = vmatpush1.msra.mxu0 0.0
          %714 = vmatprep.subr.mxu0 0.0
          %715 = vmatpush1.msra.mxu0 0.0
          %716 = vmatprep.subr.mxu0 0.0
          %717 = vmatpush1.msra.mxu0 0.0
          %718 = vmatprep.subr.mxu0 0.0
          %719 = vmatpush1.msra.mxu0 0.0
          %720 = vmatprep.subr.mxu0 0.0
          %721 = vmatpush1.msra.mxu0 0.0
          %722 = vmatprep.subr.mxu0 0.0
          %723 = vmatpush1.msra.mxu0 0.0
          %724 = vmatprep.subr.mxu0 0.0
          %725 = vmatpush1.msra.mxu0 0.0
          %726 = vmatprep.subr.mxu0 0.0
          %727 = vmatpush1.msra.mxu0 0.0
          %728 = vmatprep.subr.mxu0 0.0
          %729 = vmatpush1.msra.mxu0 0.0
          %730 = vmatprep.subr.mxu0 0.0
          %731 = vmatpush1.msra.mxu0 0.0
          %732 = vmatprep.subr.mxu0 0.0
          %733 = vmatpush1.msra.mxu0 0.0
          %734 = vmatprep.subr.mxu0 0.0
          %735 = vmatpush1.msra.mxu0 0.0
          %736 = vmatprep.subr.mxu0 0.0
          %737 = vmatpush1.msra.mxu0 0.0
          %738 = vmatprep.mubr.f32.mxu0 0.0
          %739 = vmatmul.mubr.f32.gmra.mrb[0].mxu0 %v673
          %v740 = vpop.f32.mrb[0].mxu0
          %v741 = vadd.f32 0.0, %v740
          %v742 = vpop.f32.mrb[0].mxu0
          %743 = vdwg.mxu0
          %v744 = vxor.u32 %v741, 2147483648
          %v745 = vmul.f32 %v744, 1.442695
          %v746 = vpow.pop %v745
          %v747 = vadd.f32 %v746, 1.0
          %v748 = vrcp.pop %v747
          %v749 = vmul.f32 1.0, %v748
          %v750 = vadd.f32 %v749, 1.0
          %vm751 = vcmask 130048
          %v753 = vsel %vm751, %v750, 0
          %755 = vmatprep.subr.mxu0 0.0
          %756 = vmatpush1.msra.mxu0 %v575
          %757 = vmatprep.subr.mxu0 0.0
          %758 = vmatpush1.msra.mxu0 %v576
          %759 = vmatprep.subr.mxu0 0.0
          %760 = vmatpush1.msra.mxu0 0.0
          %761 = vmatprep.subr.mxu0 0.0
          %762 = vmatpush1.msra.mxu0 0.0
          %763 = vmatprep.subr.mxu0 0.0
          %764 = vmatpush1.msra.mxu0 0.0
          %765 = vmatprep.subr.mxu0 0.0
          %766 = vmatpush1.msra.mxu0 0.0
          %767 = vmatprep.subr.mxu0 0.0
          %768 = vmatpush1.msra.mxu0 0.0
          %769 = vmatprep.subr.mxu0 0.0
          %770 = vmatpush1.msra.mxu0 0.0
          %771 = vmatprep.subr.mxu0 0.0
          %772 = vmatpush1.msra.mxu0 0.0
          %773 = vmatprep.subr.mxu0 0.0
          %774 = vmatpush1.msra.mxu0 0.0
          %775 = vmatprep.subr.mxu0 0.0
          %776 = vmatpush1.msra.mxu0 0.0
          %777 = vmatprep.subr.mxu0 0.0
          %778 = vmatpush1.msra.mxu0 0.0
          %779 = vmatprep.subr.mxu0 0.0
          %780 = vmatpush1.msra.mxu0 0.0
          %781 = vmatprep.subr.mxu0 0.0
          %782 = vmatpush1.msra.mxu0 0.0
          %783 = vmatprep.subr.mxu0 0.0
          %784 = vmatpush1.msra.mxu0 0.0
          %785 = vmatprep.subr.mxu0 0.0
          %786 = vmatpush1.msra.mxu0 0.0
          %787 = vmatprep.subr.mxu0 0.0
          %788 = vmatpush1.msra.mxu0 0.0
          %789 = vmatprep.subr.mxu0 0.0
          %790 = vmatpush1.msra.mxu0 0.0
          %791 = vmatprep.subr.mxu0 0.0
          %792 = vmatpush1.msra.mxu0 0.0
          %793 = vmatprep.subr.mxu0 0.0
          %794 = vmatpush1.msra.mxu0 0.0
          %795 = vmatprep.subr.mxu0 0.0
          %796 = vmatpush1.msra.mxu0 0.0
          %797 = vmatprep.subr.mxu0 0.0
          %798 = vmatpush1.msra.mxu0 0.0
          %799 = vmatprep.subr.mxu0 0.0
          %800 = vmatpush1.msra.mxu0 0.0
          %801 = vmatprep.subr.mxu0 0.0
          %802 = vmatpush1.msra.mxu0 0.0
          %803 = vmatprep.subr.mxu0 0.0
          %804 = vmatpush1.msra.mxu0 0.0
          %805 = vmatprep.subr.mxu0 0.0
          %806 = vmatpush1.msra.mxu0 0.0
          %807 = vmatprep.subr.mxu0 0.0
          %808 = vmatpush1.msra.mxu0 0.0
          %809 = vmatprep.subr.mxu0 0.0
          %810 = vmatpush1.msra.mxu0 0.0
          %811 = vmatprep.subr.mxu0 0.0
          %812 = vmatpush1.msra.mxu0 0.0
          %813 = vmatprep.subr.mxu0 0.0
          %814 = vmatpush1.msra.mxu0 0.0
          %815 = vmatprep.subr.mxu0 0.0
          %816 = vmatpush1.msra.mxu0 0.0
          %817 = vmatprep.subr.mxu0 0.0
          %818 = vmatpush1.msra.mxu0 0.0
          %819 = vmatprep.mubr.f32.mxu0 0.0
          %820 = vmatmul.mubr.f32.gmra.mrb[0].mxu0 %v753
          %v821 = vpop.f32.mrb[0].mxu0
          %v822 = vadd.f32 0.0, %v821
          %v823 = vpop.f32.mrb[0].mxu0
          %824 = vdwg.mxu0
          %v825 = vmul.f32 %v585, %v822
          %s826 = scalar_lea.vmem %s271, %s583 [#allocation2]
          %827 = vst [vmem:[%s826] sm:$0xff] %v825
        $region60: #{tpu_custom_call.1} parent=47 // loop_footer
          %s582 = sadd.s32 1, %s578
        $region61: #{tpu_custom_call.1} parent=47 // loop_footer_branch
          %577 = sbr.rel target = $region57
        $region62: #{tpu_custom_call.1} parent=47 // loop_exit
          _
        %s828 = sand.u32 %s181, 1
        %s829 = scalar_lea.sflag [#allocation3], %s828
        %s830 = sand.u32 %s181, 1
        %s831 = smul.addr %s830, 32
        %s832 = scalar_lea.vmem [#allocation2], %s831
        // Predicated region
        $region63: #{tpu_custom_call.1} parent=47 // pred_check
          %p833 = pneg %p191
        $region64: #{tpu_custom_call.1} parent=47 // pred_check_branch
          %835 = sbr.rel (%p833) target = $region66
        $region65: #{tpu_custom_call.1} parent=47 // pred_region
          %s837 = ssub.s32 512, 512
          %838 = vsyncadd %s829, %s837
          %s839 = smul.addr %s21, 4
          %s840 = smul.addr %s839, 128
          %s841 = scalar_lea.hbm %s7, %s840
          %s842 = sshll.u32 %s832, 4
          %s843 = int_to_ptr.vmem [resolvable:$true] %s842
          %848 = dma.vmem_to_hbm [thread:$0]  %s843, 512, %s841, %s829, 128, 128, 8
        $region66: #{tpu_custom_call.1} parent=47 // pred_fallthru
          _
      $region48: #{tpu_custom_call.1} parent=5 // pred_fallthru
        _
      %p849 = scmp.le.s32.totalorder 2, %s16
      // Predicated region
      $region67: #{tpu_custom_call.1} parent=5 // pred_check
        %p850 = pneg %p849
      $region68: #{tpu_custom_call.1} parent=5 // pred_check_branch
        %852 = sbr.rel (%p850) target = $region70
      $region69: #{tpu_custom_call.1} parent=5 // pred_region
        %s853 = ssub.s32 %s16, 2
        // Predicated region
        $region71: #{tpu_custom_call.1} parent=69 // pred_check
          %p854 = pneg %p197
        $region72: #{tpu_custom_call.1} parent=69 // pred_check_branch
          %856 = sbr.rel (%p854) target = $region74
        $region73: #{tpu_custom_call.1} parent=69 // pred_region
          %s857 = sand.u32 %s182, 1
          %s858 = scalar_lea.sflag [#allocation3], %s857
          %s859 = sand.u32 %s182, 1
          %s860 = smul.addr %s859, 32
          %s861 = scalar_lea.vmem [#allocation2], %s860
          %862 = dma.done %s858, 512
        $region74: #{tpu_custom_call.1} parent=69 // pred_fallthru
          _
      $region70: #{tpu_custom_call.1} parent=5 // pred_fallthru
        _
    $region6: #{tpu_custom_call.1} parent=1 // loop_footer
      %s20 = sadd.s32 1, %s16
    $region7: #{tpu_custom_call.1} parent=1 // loop_footer_branch
      %15 = sbr.rel target = $region3
    $region8: #{tpu_custom_call.1} parent=1 // loop_exit
      _
    %863 = vsyncpa [#allocation3], 1
    %s864 = scalar_lea.sflag [#allocation3], 1
    %865 = vsyncpa %s864, 1

</llo_original>
